<compile_context>
chip_gen: v5e
topology: v5e:2x2
jax: 0.10.0
libtpu: 0.0.40
codegen_flags: <defaults>
</compile_context>

<pallas_src>
import functools

import jax
import jax.numpy as jnp
from jax.experimental import pallas as pl
from jax.experimental.pallas import tpu as pltpu


def _downsample2d_kernel(ev_ref, od_ref, w_ref, b_ref, o_ref, *, compute_dtype):
    # ev_ref / od_ref : (Ho, Wo, 2C)   even-row / odd-row slabs, last axis = [even-col | odd-col]
    # w_ref           : (9C, C)        packed taps (see wrapper for the row ordering)
    # b_ref           : (1, C)
    # o_ref           : (Ho, Wo, C)
    Ho, Wo, C2 = ev_ref.shape
    C = C2 // 2
    M = Ho * Wo
    f32 = jnp.float32

    # (Ho, Wo, 2C) -> (M, 2C) is a leading-dim collapse: layout preserving, no relayout.
    E = ev_ref[...].reshape(M, C2).astype(compute_dtype)   # [ x[2i,   2j] | x[2i,   2j+1] ] = [ee | eo]
    O = od_ref[...].reshape(M, C2).astype(compute_dtype)   # [ x[2i+1, 2j] | x[2i+1, 2j+1] ] = [oe | oo]

    w = w_ref[...].astype(compute_dtype)
    w_e = w[0 * C:2 * C]   # [W(1,1); W(1,2)]  acts on E,        no output shift
    w_o = w[2 * C:4 * C]   # [W(2,1); W(2,2)]  acts on O,        no output shift
    w_i = w[4 * C:6 * C]   # [W(0,1); W(0,2)]  acts on O,        output shifted down one row
    w_j = w[6 * C:8 * C]   # [W(1,0); W(2,0)]  acts on [eo|oo],  output shifted right one col
    w_c = w[8 * C:9 * C]   # [W(0,0)]          acts on oo,       output shifted down + right

    def shift_rows(z, k):
        # z[m] <- z[m - k], zero fill at the top (the conv's zero padding).
        return jnp.concatenate([jnp.zeros((k, z.shape[1]), z.dtype), z[:M - k]], axis=0)

    m_ids = jax.lax.broadcasted_iota(jnp.int32, (M, 1), 0)
    not_left_col = (m_ids % Wo) != 0     # output columns j >= 1 (j == 0 reads zero padding)

    # Taps whose receptive field needs no shift: (1,1),(1,2) on E and (2,1),(2,2) on O.
    acc = jnp.dot(E, w_e, preferred_element_type=f32)
    acc = acc + jnp.dot(O, w_o, preferred_element_type=f32)

    # kh = 0, kw in {1,2}: odd-row slab of the PREVIOUS output row.
    acc = acc + shift_rows(jnp.dot(O, w_i, preferred_element_type=f32), Wo)

    # kw = 0, kh in {1,2}: odd-column phases of the PREVIOUS output column.
    eo_oo = jnp.concatenate([E[:, C:], O[:, C:]], axis=1)
    acc = acc + jnp.where(
        not_left_col,
        shift_rows(jnp.dot(eo_oo, w_j, preferred_element_type=f32), 1), 0.0)

    # kh = 0, kw = 0 corner tap: previous output row AND column, odd-row/odd-col phase.
    acc = acc + jnp.where(
        not_left_col,
        shift_rows(jnp.dot(O[:, C:], w_c, preferred_element_type=f32), Wo + 1), 0.0)

    acc = acc + b_ref[...].astype(f32)
    o_ref[...] = acc.reshape(Ho, Wo, C).astype(o_ref.dtype)


def downsample2d_nhwc(x, w_hwio, b, *, compute_dtype=jnp.bfloat16):
    """x: (B, H, W, C) NHWC; w_hwio: (3, 3, Cin, Cout); b: (Cout,)."""
    B, H, W, C = x.shape
    assert H % 2 == 0 and W % 2 == 0, "stride-2 / pad-1 fast path assumes even H, W"
    assert w_hwio.shape == (3, 3, C, C)
    Ho, Wo = H // 2, W // 2

    # Free, metadata-only view of the stride-2 phase structure.
    x5 = x.reshape(B, Ho, 2, Wo, 2 * C)

    # Pack the 9 taps by shift group, in the order the kernel slices them.
    wp = jnp.concatenate(
        [w_hwio[1, 1], w_hwio[1, 2],     # unshifted, even-row slab
         w_hwio[2, 1], w_hwio[2, 2],     # unshifted, odd-row slab
         w_hwio[0, 1], w_hwio[0, 2],     # shifted down one output row
         w_hwio[1, 0], w_hwio[2, 0],     # shifted right one output column
         w_hwio[0, 0]], axis=0)          # shifted down + right (corner)
    b2 = b.reshape(1, C).astype(jnp.float32)

    def slab_spec(phase):
        return pl.BlockSpec((None, Ho, None, Wo, 2 * C),
                            lambda bb, p=phase: (bb, 0, p, 0, 0))

    kernel = functools.partial(_downsample2d_kernel, compute_dtype=compute_dtype)
    return pl.pallas_call(
        kernel,
        out_shape=jax.ShapeDtypeStruct((B, Ho, Wo, C), x.dtype),
        grid=(B,),
        in_specs=[
            slab_spec(0),                                   # even input rows
            slab_spec(1),                                   # odd input rows
            pl.BlockSpec((9 * C, C), lambda bb: (0, 0)),    # packed weights
            pl.BlockSpec((1, C), lambda bb: (0, 0)),        # bias
        ],
        out_specs=pl.BlockSpec((None, Ho, Wo, C), lambda bb: (bb, 0, 0, 0)),
        compiler_params=pltpu.CompilerParams(
            dimension_semantics=("parallel",),
            vmem_limit_bytes=64 << 20,
        ),
    )(x5, x5, wp, b2)


def downsample2d(x_nchw, w_oihw, b, **kw):
    """PyTorch-layout entry point: x (B, C, H, W), weight (Cout, Cin, 3, 3), bias (Cout,)."""
    x = jnp.transpose(x_nchw, (0, 2, 3, 1))          # NCHW -> NHWC (layout plumbing only)
    w = jnp.transpose(w_oihw, (2, 3, 1, 0))          # OIHW -> HWIO
    y = downsample2d_nhwc(x, w, b, **kw)
    return jnp.transpose(y, (0, 3, 1, 2))            # back to NCHW


if __name__ == "__main__":
    key = jax.random.PRNGKey(0)
    B, C, H, W = 2, 128, 16, 16

    kx, kw_, kb = jax.random.split(key, 3)
    x = jax.random.normal(kx, (B, C, H, W), jnp.float32)
    fan_in = 9 * C
    bound = 1.0 / (fan_in ** 0.5)                                       # nn.Conv2d default init
    w = jax.random.uniform(kw_, (C, C, 3, 3), jnp.float32, -bound, bound)   # OIHW
    b = jax.random.uniform(kb, (C,), jnp.float32, -bound, bound)

    fwd = jax.jit(downsample2d)
    y = jax.block_until_ready(fwd(x, w, b))
    assert y.shape == (B, C, H // 2, W // 2)

    # Reference: XLA conv with the module's exact semantics (tolerance covers bf16 MXU operands).
    ref = jax.lax.conv_general_dilated(
        x, w, window_strides=(2, 2), padding=((1, 1), (1, 1)),
        dimension_numbers=("NCHW", "OIHW", "NCHW")) + b[None, :, None, None]
    max_err = float(jnp.max(jnp.abs(y - ref)))
    assert jnp.allclose(y, ref, atol=5e-2, rtol=5e-2), max_err

    print("KERNEL_OK")
</pallas_src>

<mosaic_0001>
module attributes {stable_mosaic.version = 11 : i64} {
  func.func @_downsample2d_kernel(%arg0: i32, %arg1: memref<1x8x1x8x256xf32, #tpu.memory_space<vmem>>, %arg2: memref<1x8x1x8x256xf32, #tpu.memory_space<vmem>>, %arg3: memref<1152x128xf32, #tpu.memory_space<vmem>>, %arg4: memref<1x128xf32, #tpu.memory_space<vmem>>, %arg5: memref<1x8x8x128xf32, #tpu.memory_space<vmem>>) attributes {dimension_semantics = [#tpu.dimension_semantics<parallel>], iteration_bounds = array<i64: 2>, scalar_prefetch = 0 : i64, scratch_operands = 0 : i64, tpu.core_type = #tpu.core_type<tc>, window_params = [{transform_indices = @transform_0, window_bounds = array<i64: 1, 8, 1, 8, 256>}, {transform_indices = @transform_1, window_bounds = array<i64: 1, 8, 1, 8, 256>}, {pipeline_mode = #tpu.pipeline_mode<synchronous>, transform_indices = @transform_2, window_bounds = array<i64: 1152, 128>}, {pipeline_mode = #tpu.pipeline_mode<synchronous>, transform_indices = @transform_3, window_bounds = array<i64: 1, 128>}, {transform_indices = @transform_4, window_bounds = array<i64: 1, 8, 8, 128>}]} {
    %c0 = arith.constant 0 : index
    %c0_0 = arith.constant 0 : index
    %c0_1 = arith.constant 0 : index
    %c0_2 = arith.constant 0 : index
    %c0_3 = arith.constant 0 : index
    %0 = vector.load %arg1[%c0, %c0_0, %c0_1, %c0_2, %c0_3] : memref<1x8x1x8x256xf32, #tpu.memory_space<vmem>>, vector<1x8x1x8x256xf32>
    %1 = vector.shape_cast %0 : vector<1x8x1x8x256xf32> to vector<8x8x256xf32>
    %2 = vector.shape_cast %1 : vector<8x8x256xf32> to vector<64x256xf32>
    %3 = arith.truncf %2 : vector<64x256xf32> to vector<64x256xbf16>
    %c0_4 = arith.constant 0 : index
    %c0_5 = arith.constant 0 : index
    %c0_6 = arith.constant 0 : index
    %c0_7 = arith.constant 0 : index
    %c0_8 = arith.constant 0 : index
    %4 = vector.load %arg2[%c0_4, %c0_5, %c0_6, %c0_7, %c0_8] : memref<1x8x1x8x256xf32, #tpu.memory_space<vmem>>, vector<1x8x1x8x256xf32>
    %5 = vector.shape_cast %4 : vector<1x8x1x8x256xf32> to vector<8x8x256xf32>
    %6 = vector.shape_cast %5 : vector<8x8x256xf32> to vector<64x256xf32>
    %7 = arith.truncf %6 : vector<64x256xf32> to vector<64x256xbf16>
    %c0_9 = arith.constant 0 : index
    %c0_10 = arith.constant 0 : index
    %8 = vector.load %arg3[%c0_9, %c0_10] : memref<1152x128xf32, #tpu.memory_space<vmem>>, vector<1152x128xf32>
    %9 = arith.truncf %8 : vector<1152x128xf32> to vector<1152x128xbf16>
    %10 = vector.extract_strided_slice %9 {offsets = [0, 0], sizes = [256, 128], strides = [1, 1]} : vector<1152x128xbf16> to vector<256x128xbf16>
    %11 = vector.extract_strided_slice %9 {offsets = [256, 0], sizes = [256, 128], strides = [1, 1]} : vector<1152x128xbf16> to vector<256x128xbf16>
    %12 = vector.extract_strided_slice %9 {offsets = [512, 0], sizes = [256, 128], strides = [1, 1]} : vector<1152x128xbf16> to vector<256x128xbf16>
    %13 = vector.extract_strided_slice %9 {offsets = [768, 0], sizes = [256, 128], strides = [1, 1]} : vector<1152x128xbf16> to vector<256x128xbf16>
    %14 = vector.extract_strided_slice %9 {offsets = [1024, 0], sizes = [128, 128], strides = [1, 1]} : vector<1152x128xbf16> to vector<128x128xbf16>
    %15 = tpu.iota {dimensions = array<i32: 0>} : vector<64x1xi32>
    %c8_i32 = arith.constant 8 : i32
    %c0_i32 = arith.constant 0 : i32
    %16 = arith.cmpi eq, %c8_i32, %c0_i32 : i32
    %c1_i32 = arith.constant 1 : i32
    %17 = arith.select %16, %c1_i32, %c8_i32 : i32
    %18 = vector.broadcast %17 : i32 to vector<64x1xi32>
    %19 = arith.remsi %15, %18 : vector<64x1xi32>
    %c0_i32_11 = arith.constant 0 : i32
    %20 = vector.broadcast %c0_i32_11 : i32 to vector<64x1xi32>
    %21 = arith.cmpi ne, %19, %20 : vector<64x1xi32>
    %c0_i32_12 = arith.constant 0 : i32
    %22 = vector.broadcast %c0_i32_12 : i32 to vector<64x1xi32>
    %23 = arith.cmpi slt, %19, %22 : vector<64x1xi32>
    %c0_i32_13 = arith.constant 0 : i32
    %24 = arith.cmpi slt, %17, %c0_i32_13 : i32
    %25 = vector.broadcast %24 : i1 to vector<64x1xi1>
    %26 = vector.broadcast %25 : vector<64x1xi1> to vector<64x1xi1>
    %27 = arith.xori %23, %26 : vector<64x1xi1>
    %28 = arith.andi %27, %21 : vector<64x1xi1>
    %29 = vector.broadcast %17 : i32 to vector<64x1xi32>
    %30 = arith.addi %19, %29 : vector<64x1xi32>
    %31 = arith.select %28, %30, %19 : vector<64x1xi1>, vector<64x1xi32>
    %c0_i32_14 = arith.constant 0 : i32
    %32 = vector.broadcast %c0_i32_14 : i32 to vector<64x1xi32>
    %33 = arith.cmpi ne, %31, %32 : vector<64x1xi32>
    %cst = arith.constant dense<0.000000e+00> : vector<64x128xf32>
    %34 = tpu.matmul %3, %10, %cst {dimension_numbers = #tpu.dot_dimension_numbers<[1], [0], [0], [1], [0, 0, 1, 1], [], []>} : vector<64x256xbf16>, vector<256x128xbf16>, vector<64x128xf32> -> vector<64x128xf32>
    %cst_15 = arith.constant dense<0.000000e+00> : vector<64x128xf32>
    %35 = tpu.matmul %7, %11, %cst_15 {dimension_numbers = #tpu.dot_dimension_numbers<[1], [0], [0], [1], [0, 0, 1, 1], [], []>} : vector<64x256xbf16>, vector<256x128xbf16>, vector<64x128xf32> -> vector<64x128xf32>
    %36 = arith.addf %34, %35 : vector<64x128xf32>
    %cst_16 = arith.constant dense<0.000000e+00> : vector<64x128xf32>
    %37 = tpu.matmul %7, %12, %cst_16 {dimension_numbers = #tpu.dot_dimension_numbers<[1], [0], [0], [1], [0, 0, 1, 1], [], []>} : vector<64x256xbf16>, vector<256x128xbf16>, vector<64x128xf32> -> vector<64x128xf32>
    %cst_17 = arith.constant 0.000000e+00 : f32
    %38 = vector.broadcast %cst_17 : f32 to vector<8x128xf32>
    %39 = vector.extract_strided_slice %37 {offsets = [0, 0], sizes = [56, 128], strides = [1, 1]} : vector<64x128xf32> to vector<56x128xf32>
    %40 = tpu.concatenate %38, %39 in 0 : vector<8x128xf32>, vector<56x128xf32> -> vector<64x128xf32>
    %41 = arith.addf %36, %40 : vector<64x128xf32>
    %42 = vector.extract_strided_slice %3 {offsets = [0, 128], sizes = [64, 128], strides = [1, 1]} : vector<64x256xbf16> to vector<64x128xbf16>
    %43 = vector.extract_strided_slice %7 {offsets = [0, 128], sizes = [64, 128], strides = [1, 1]} : vector<64x256xbf16> to vector<64x128xbf16>
    %44 = tpu.concatenate %42, %43 in 1 : vector<64x128xbf16>, vector<64x128xbf16> -> vector<64x256xbf16>
    %cst_18 = arith.constant dense<0.000000e+00> : vector<64x128xf32>
    %45 = tpu.matmul %44, %13, %cst_18 {dimension_numbers = #tpu.dot_dimension_numbers<[1], [0], [0], [1], [0, 0, 1, 1], [], []>} : vector<64x256xbf16>, vector<256x128xbf16>, vector<64x128xf32> -> vector<64x128xf32>
    %cst_19 = arith.constant 0.000000e+00 : f32
    %46 = vector.broadcast %cst_19 : f32 to vector<1x128xf32>
    %47 = vector.extract_strided_slice %45 {offsets = [0, 0], sizes = [63, 128], strides = [1, 1]} : vector<64x128xf32> to vector<63x128xf32>
    %48 = tpu.concatenate %46, %47 in 0 : vector<1x128xf32>, vector<63x128xf32> -> vector<64x128xf32>
    %cst_20 = arith.constant 0.000000e+00 : f32
    %49 = vector.shape_cast %33 : vector<64x1xi1> to vector<64x1xi1>
    %50 = vector.broadcast %49 : vector<64x1xi1> to vector<64x128xi1>
    %51 = vector.broadcast %cst_20 : f32 to vector<64x128xf32>
    %52 = arith.select %50, %48, %51 : vector<64x128xi1>, vector<64x128xf32>
    %53 = arith.addf %41, %52 : vector<64x128xf32>
    %54 = vector.extract_strided_slice %7 {offsets = [0, 128], sizes = [64, 128], strides = [1, 1]} : vector<64x256xbf16> to vector<64x128xbf16>
    %cst_21 = arith.constant dense<0.000000e+00> : vector<64x128xf32>
    %55 = tpu.matmul %54, %14, %cst_21 {dimension_numbers = #tpu.dot_dimension_numbers<[1], [0], [0], [1], [0, 0, 1, 1], [], []>} : vector<64x128xbf16>, vector<128x128xbf16>, vector<64x128xf32> -> vector<64x128xf32>
    %cst_22 = arith.constant 0.000000e+00 : f32
    %56 = vector.broadcast %cst_22 : f32 to vector<9x128xf32>
    %57 = vector.extract_strided_slice %55 {offsets = [0, 0], sizes = [55, 128], strides = [1, 1]} : vector<64x128xf32> to vector<55x128xf32>
    %58 = tpu.concatenate %56, %57 in 0 : vector<9x128xf32>, vector<55x128xf32> -> vector<64x128xf32>
    %cst_23 = arith.constant 0.000000e+00 : f32
    %59 = vector.shape_cast %33 : vector<64x1xi1> to vector<64x1xi1>
    %60 = vector.broadcast %59 : vector<64x1xi1> to vector<64x128xi1>
    %61 = vector.broadcast %cst_23 : f32 to vector<64x128xf32>
    %62 = arith.select %60, %58, %61 : vector<64x128xi1>, vector<64x128xf32>
    %63 = arith.addf %53, %62 : vector<64x128xf32>
    %c0_24 = arith.constant 0 : index
    %c0_25 = arith.constant 0 : index
    %64 = vector.load %arg4[%c0_24, %c0_25] : memref<1x128xf32, #tpu.memory_space<vmem>>, vector<1x128xf32>
    %65 = vector.broadcast %64 : vector<1x128xf32> to vector<64x128xf32>
    %66 = arith.addf %63, %65 : vector<64x128xf32>
    %67 = vector.shape_cast %66 : vector<64x128xf32> to vector<8x8x128xf32>
    %c0_26 = arith.constant 0 : index
    %c0_27 = arith.constant 0 : index
    %c0_28 = arith.constant 0 : index
    %c0_29 = arith.constant 0 : index
    %68 = vector.load %arg5[%c0_26, %c0_27, %c0_28, %c0_29] : memref<1x8x8x128xf32, #tpu.memory_space<vmem>>, vector<1x8x8x128xf32>
    %69 = vector.shape_cast %68 : vector<1x8x8x128xf32> to vector<8x8x128xf32>
    %70 = vector.shape_cast %67 : vector<8x8x128xf32> to vector<1x8x8x128xf32>
    tpu.vector_store %arg5[%c0_26, %c0_27, %c0_28, %c0_29], %70 {strides = array<i32>} : memref<1x8x8x128xf32, #tpu.memory_space<vmem>>, vector<1x8x8x128xf32>,
    return
  }
  func.func @transform_0(%arg0: i32) -> (i32, i32, i32, i32, i32) {
    %c0_i32 = arith.constant 0 : i32
    %c0_i32_0 = arith.constant 0 : i32
    %c0_i32_1 = arith.constant 0 : i32
    %c0_i32_2 = arith.constant 0 : i32
    %c0_i32_3 = arith.constant 0 : i32
    return %arg0, %c0_i32, %c0_i32_0, %c0_i32_1, %c0_i32_2 : i32, i32, i32, i32, i32
  }
  func.func @transform_1(%arg0: i32) -> (i32, i32, i32, i32, i32) {
    %c0_i32 = arith.constant 0 : i32
    %c1_i32 = arith.constant 1 : i32
    %c0_i32_0 = arith.constant 0 : i32
    %c0_i32_1 = arith.constant 0 : i32
    %c0_i32_2 = arith.constant 0 : i32
    return %arg0, %c0_i32, %c1_i32, %c0_i32_0, %c0_i32_1 : i32, i32, i32, i32, i32
  }
  func.func @transform_2(%arg0: i32) -> (i32, i32) {
    %c0_i32 = arith.constant 0 : i32
    %c0_i32_0 = arith.constant 0 : i32
    %c0_i32_1 = arith.constant 0 : i32
    return %c0_i32, %c0_i32_0 : i32, i32
  }
  func.func @transform_3(%arg0: i32) -> (i32, i32) {
    %c0_i32 = arith.constant 0 : i32
    %c0_i32_0 = arith.constant 0 : i32
    %c0_i32_1 = arith.constant 0 : i32
    return %c0_i32, %c0_i32_0 : i32, i32
  }
  func.func @transform_4(%arg0: i32) -> (i32, i32, i32, i32) {
    %c0_i32 = arith.constant 0 : i32
    %c0_i32_0 = arith.constant 0 : i32
    %c0_i32_1 = arith.constant 0 : i32
    %c0_i32_2 = arith.constant 0 : i32
    return %arg0, %c0_i32, %c0_i32_0, %c0_i32_1 : i32, i32, i32, i32
  }
}

</mosaic_0001>

<llo_original>
// kernel: downsample2d.1
$region0: #{downsample2d.1}
  #allocation0 [shape = 'u32[]', space=smem, size = 0x4, offset = 0x4, fixed_abs, tag = 'smem constant byte address 0x4 - core index']
  #allocation1 [shape = 'u32[72,128]{1,0:T(1,128)}', space=vmem, size = 0x9000, scoped, tag = 'internal scratch']
  %s0 = inlined_call_operand.vmem [shape: f32[2,8,2,8,256], index: 0, kind: input, shape index: {}, may-alias: {0,1}]
  %s1 = inlined_call_operand.vmem [shape: f32[2,8,2,8,256], index: 1, kind: input, shape index: {}, may-alias: {0,1}]
  %s2 = inlined_call_operand.vmem [shape: f32[1152,128], index: 2, kind: input, shape index: {}]
  %s3 = inlined_call_operand.vmem [shape: f32[1,128], index: 3, kind: input, shape index: {}]
  %s4 = inlined_call_operand.hbm [shape: f32[2,8,8,128], index: 4, kind: output, shape index: {}]
  %s5 = sld [smem:[#allocation0]]
  $region95: #{downsample2d.1} parent=0
    _
  %s7 = ssub.s32 1, %s5
  %s8 = scalar_select 0, %s7, %s5
  $region1: #{downsample2d.1} parent=0
    #allocation2 [shape = 'u8[131072]{0}', space=vmem, size = 0x20000, scoped, tag = 'input window, operand 0']
    #allocation3 [shape = 'u8[131072]{0}', space=vmem, size = 0x20000, scoped, tag = 'input window, operand 1']
    #allocation4 [shape = 'u8[65536]{0}', space=vmem, size = 0x10000, scoped, tag = 'output window, operand 0']
    #allocation5 [shape = 's32[2]{0}', space=sflag, size = 0x8, scoped, tag = 'scoped memory for downsample2d.1']
    %9 = vsyncpa [#allocation5], 0
    %s10 = scalar_lea.sflag [#allocation5], 1
    %11 = vsyncpa %s10, 0
    loop: start=0, step=1, limit=4
    $region2: #{downsample2d.1} parent=1 // loop_pre_header
      _
    $region3: #{downsample2d.1} parent=1 // loop_header
      %s13 = sphi 0, %s17
      %p14 = scmp.ge.s32.totalorder %s13, 4
      %s23 = sphi 0, %s25
      %s26 = sphi 0, %s23
      %s27 = sphi 0, %s26
      %s43 = sphi 0, %s27
      %s49 = sphi 0, %s51
      %s52 = sphi 0, %s49
      %s53 = sphi 0, %s52
      %s69 = sphi 0, %s53
      %s73 = sphi 0, %s73
      %s75 = sphi 0, %s73
      %s76 = sphi 0, %s75
      %s90 = sphi 0, %s76
      %s94 = sphi 0, %s94
      %s96 = sphi 0, %s94
      %s97 = sphi 0, %s96
      %s111 = sphi 0, %s97
      %s117 = sphi 0, %s119
      %s120 = sphi 0, %s117
      %s121 = sphi 0, %s120
      %s137 = sphi 0, %s121
    $region4: #{downsample2d.1} parent=1 // loop_header_branch
      %16 = sbr.rel (%p14) target = $region8
    $region5: #{downsample2d.1} parent=1 // loop_body
      %s18 = ssub.s32 %s13, 1
      %s19 = ssub.s32 %s13, 2
      %s20 = sadd.s32 %s13, 1
      %s21 = ssub.s32 %s13, %s20
      %p22 = scmp.eq.s32.totalorder %s21, 0
      %s24 = sadd.s32 %s23, 1
      %s25 = scalar_select %p22, %s23, %s24
      %p28 = pneg %p22
      %p29 = scmp.eq.s32.totalorder %s13, 1
      %p30 = por %p28, %p29
      %p31 = scmp.ne.s32.totalorder %s23, %s26
      %p32 = scmp.eq.s32.totalorder %s13, 0
      %p33 = por %p31, %p32
      %p34 = scmp.ne.s32.totalorder %s23, %s26
      %p35 = scmp.eq.s32.totalorder %s18, 1
      %p36 = por %p34, %p35
      %p37 = scmp.ne.s32.totalorder %s26, %s27
      %p38 = scmp.eq.s32.totalorder %s18, 0
      %p39 = por %p37, %p38
      %p40 = scmp.ne.s32.totalorder %s26, %s27
      %p41 = scmp.eq.s32.totalorder %s19, 1
      %p42 = por %p40, %p41
      %p44 = scmp.ne.s32.totalorder %s27, %s43
      %p45 = scmp.eq.s32.totalorder %s19, 0
      %p46 = por %p44, %p45
      %s47 = ssub.s32 %s13, %s20
      %p48 = scmp.eq.s32.totalorder %s47, 0
      %s50 = sadd.s32 %s49, 1
      %s51 = scalar_select %p48, %s49, %s50
      %p54 = pneg %p48
      %p55 = scmp.eq.s32.totalorder %s13, 1
      %p56 = por %p54, %p55
      %p57 = scmp.ne.s32.totalorder %s49, %s52
      %p58 = scmp.eq.s32.totalorder %s13, 0
      %p59 = por %p57, %p58
      %p60 = scmp.ne.s32.totalorder %s49, %s52
      %p61 = scmp.eq.s32.totalorder %s18, 1
      %p62 = por %p60, %p61
      %p63 = scmp.ne.s32.totalorder %s52, %s53
      %p64 = scmp.eq.s32.totalorder %s18, 0
      %p65 = por %p63, %p64
      %p66 = scmp.ne.s32.totalorder %s52, %s53
      %p67 = scmp.eq.s32.totalorder %s19, 1
      %p68 = por %p66, %p67
      %p70 = scmp.ne.s32.totalorder %s53, %s69
      %p71 = scmp.eq.s32.totalorder %s19, 0
      %p72 = por %p70, %p71
      %s74 = sadd.s32 %s73, 1
      %p77 = scmp.eq.s32.totalorder %s13, 1
      %p78 = scmp.ne.s32.totalorder %s73, %s75
      %p79 = scmp.eq.s32.totalorder %s13, 0
      %p80 = por %p78, %p79
      %p81 = scmp.ne.s32.totalorder %s73, %s75
      %p82 = scmp.eq.s32.totalorder %s18, 1
      %p83 = por %p81, %p82
      %p84 = scmp.ne.s32.totalorder %s75, %s76
      %p85 = scmp.eq.s32.totalorder %s18, 0
      %p86 = por %p84, %p85
      %p87 = scmp.ne.s32.totalorder %s75, %s76
      %p88 = scmp.eq.s32.totalorder %s19, 1
      %p89 = por %p87, %p88
      %p91 = scmp.ne.s32.totalorder %s76, %s90
      %p92 = scmp.eq.s32.totalorder %s19, 0
      %p93 = por %p91, %p92
      %s95 = sadd.s32 %s94, 1
      %p98 = scmp.eq.s32.totalorder %s13, 1
      %p99 = scmp.ne.s32.totalorder %s94, %s96
      %p100 = scmp.eq.s32.totalorder %s13, 0
      %p101 = por %p99, %p100
      %p102 = scmp.ne.s32.totalorder %s94, %s96
      %p103 = scmp.eq.s32.totalorder %s18, 1
      %p104 = por %p102, %p103
      %p105 = scmp.ne.s32.totalorder %s96, %s97
      %p106 = scmp.eq.s32.totalorder %s18, 0
      %p107 = por %p105, %p106
      %p108 = scmp.ne.s32.totalorder %s96, %s97
      %p109 = scmp.eq.s32.totalorder %s19, 1
      %p110 = por %p108, %p109
      %p112 = scmp.ne.s32.totalorder %s97, %s111
      %p113 = scmp.eq.s32.totalorder %s19, 0
      %p114 = por %p112, %p113
      %s115 = ssub.s32 %s13, %s20
      %p116 = scmp.eq.s32.totalorder %s115, 0
      %s118 = sadd.s32 %s117, 1
      %s119 = scalar_select %p116, %s117, %s118
      %p122 = pneg %p116
      %p123 = scmp.eq.s32.totalorder %s13, 1
      %p124 = por %p122, %p123
      %p125 = scmp.ne.s32.totalorder %s117, %s120
      %p126 = scmp.eq.s32.totalorder %s13, 0
      %p127 = por %p125, %p126
      %p128 = scmp.ne.s32.totalorder %s117, %s120
      %p129 = scmp.eq.s32.totalorder %s18, 1
      %p130 = por %p128, %p129
      %p131 = scmp.ne.s32.totalorder %s120, %s121
      %p132 = scmp.eq.s32.totalorder %s18, 0
      %p133 = por %p131, %p132
      %p134 = scmp.ne.s32.totalorder %s120, %s121
      %p135 = scmp.eq.s32.totalorder %s19, 1
      %p136 = por %p134, %p135
      %p138 = scmp.ne.s32.totalorder %s121, %s137
      %p139 = scmp.eq.s32.totalorder %s19, 0
      %p140 = por %p138, %p139
      %p141 = scmp.le.s32.totalorder 1, %s13
      %p142 = scmp.lt.s32.totalorder %s13, 3
      %p143 = pnand %p141, %p142
      %p144 = pneg %p143
      // Predicated region
      $region9: #{downsample2d.1} parent=5 // pred_check
        _
      $region10: #{downsample2d.1} parent=5 // pred_check_branch
        %146 = sbr.rel (%p143) target = $region12
      $region11: #{downsample2d.1} parent=5 // pred_region
        %s147 = ssub.s32 %s13, 1
        // Predicated region
        $region13: #{downsample2d.1} parent=11 // pred_check
          %p148 = pneg %p86
        $region14: #{downsample2d.1} parent=11 // pred_check_branch
          %150 = sbr.rel (%p148) target = $region16
        $region15: #{downsample2d.1} parent=11 // pred_region
          _
        $region16: #{downsample2d.1} parent=11 // pred_fallthru
          _
        // Predicated region
        $region17: #{downsample2d.1} parent=11 // pred_check
          %p151 = pneg %p107
        $region18: #{downsample2d.1} parent=11 // pred_check_branch
          %153 = sbr.rel (%p151) target = $region20
        $region19: #{downsample2d.1} parent=11 // pred_region
          _
        $region20: #{downsample2d.1} parent=11 // pred_fallthru
          _
      $region12: #{downsample2d.1} parent=5 // pred_fallthru
        _
      %p154 = scmp.lt.s32.totalorder %s13, 2
      // Predicated region
      $region21: #{downsample2d.1} parent=5 // pred_check
        %p155 = pneg %p154
      $region22: #{downsample2d.1} parent=5 // pred_check_branch
        %157 = sbr.rel (%p155) target = $region24
      $region23: #{downsample2d.1} parent=5 // pred_region
        // Predicated region
        $region25: #{downsample2d.1} parent=23 // pred_check
          %p158 = pneg %p33
        $region26: #{downsample2d.1} parent=23 // pred_check_branch
          %160 = sbr.rel (%p158) target = $region28
        $region27: #{downsample2d.1} parent=23 // pred_region
          %s161 = sand.u32 %s23, 1
          %s162 = sand.u32 %s23, 1
          %s163 = smul.addr %s162, 128
          %s164 = scalar_lea.vmem [#allocation2], %s163
          %s165 = smul.addr %s13, 32
          %s166 = smul.addr %s165, 8
          %s167 = scalar_lea.vmem %s0, %s166
          // Predicated region
          $region29: #{downsample2d.1} parent=27 // pred_check
            _
          $region30: #{downsample2d.1} parent=27 // pred_check_branch
            %169 = sbr.rel (0) target = $region32
          $region31: #{downsample2d.1} parent=27 // pred_region
            // Predicated region
            $region33: #{downsample2d.1} parent=31 // pred_check
              _
            $region34: #{downsample2d.1} parent=31 // pred_check_branch
              %171 = sbr.rel (0) target = $region36
            $region35: #{downsample2d.1} parent=31 // pred_region
              loop: start=0, step=1, limit=1
              $region37: #{downsample2d.1} parent=35 // loop_pre_header
                _
              $region38: #{downsample2d.1} parent=35 // loop_header
                %s173 = sphi 0, %s177
                %p174 = scmp.ge.s32.totalorder %s173, 1
                %s178 = sphi %s167, %s167
                %s179 = sphi %s164, %s164
              $region39: #{downsample2d.1} parent=35 // loop_header_branch
                %176 = sbr.rel (%p174) target = $region43
              $region40: #{downsample2d.1} parent=35 // loop_body
                %v180 = vld [vmem:[%s178] sm:$0xff]
                %181 = vst [vmem:[%s179] sm:$0xff] %v180
                %v182 = vld [vmem:[%s178 + $0x8] sm:$0xff]
                %183 = vst [vmem:[%s179 + $0x8] sm:$0xff] %v182
                %v184 = vld [vmem:[%s178 + $0x20] sm:$0xff]
                %185 = vst [vmem:[%s179 + $0x10] sm:$0xff] %v184
                %v186 = vld [vmem:[%s178 + $0x28] sm:$0xff]
                %187 = vst [vmem:[%s179 + $0x18] sm:$0xff] %v186
                %v188 = vld [vmem:[%s178 + $0x40] sm:$0xff]
                %189 = vst [vmem:[%s179 + $0x20] sm:$0xff] %v188
                %v190 = vld [vmem:[%s178 + $0x48] sm:$0xff]
                %191 = vst [vmem:[%s179 + $0x28] sm:$0xff] %v190
                %v192 = vld [vmem:[%s178 + $0x60] sm:$0xff]
                %193 = vst [vmem:[%s179 + $0x30] sm:$0xff] %v192
                %v194 = vld [vmem:[%s178 + $0x68] sm:$0xff]
                %195 = vst [vmem:[%s179 + $0x38] sm:$0xff] %v194
                %v196 = vld [vmem:[%s178 + $0x80] sm:$0xff]
                %197 = vst [vmem:[%s179 + $0x40] sm:$0xff] %v196
                %v198 = vld [vmem:[%s178 + $0x88] sm:$0xff]
                %199 = vst [vmem:[%s179 + $0x48] sm:$0xff] %v198
                %v200 = vld [vmem:[%s178 + $0xa0] sm:$0xff]
                %201 = vst [vmem:[%s179 + $0x50] sm:$0xff] %v200
                %v202 = vld [vmem:[%s178 + $0xa8] sm:$0xff]
                %203 = vst [vmem:[%s179 + $0x58] sm:$0xff] %v202
                %v204 = vld [vmem:[%s178 + $0xc0] sm:$0xff]
                %205 = vst [vmem:[%s179 + $0x60] sm:$0xff] %v204
                %v206 = vld [vmem:[%s178 + $0xc8] sm:$0xff]
                %207 = vst [vmem:[%s179 + $0x68] sm:$0xff] %v206
                %v208 = vld [vmem:[%s178 + $0xe0] sm:$0xff]
                %209 = vst [vmem:[%s179 + $0x70] sm:$0xff] %v208
                %v210 = vld [vmem:[%s178 + $0xe8] sm:$0xff]
                %211 = vst [vmem:[%s179 + $0x78] sm:$0xff] %v210
              $region41: #{downsample2d.1} parent=35 // loop_footer
                %s177 = sadd.s32 1, %s173
              $region42: #{downsample2d.1} parent=35 // loop_footer_branch
                %172 = sbr.rel target = $region38
              $region43: #{downsample2d.1} parent=35 // loop_exit
                _
            $region36: #{downsample2d.1} parent=31 // pred_fallthru
              _
            // Predicated region
            $region44: #{downsample2d.1} parent=31 // pred_check
              _
            $region45: #{downsample2d.1} parent=31 // pred_check_branch
              %213 = sbr.rel target = $region47
            $region46: #{downsample2d.1} parent=31 // pred_region
              _
            $region47: #{downsample2d.1} parent=31 // pred_fallthru
              _
          $region32: #{downsample2d.1} parent=27 // pred_fallthru
            _
          %214 = vnop
        $region28: #{downsample2d.1} parent=23 // pred_fallthru
          _
        // Predicated region
        $region48: #{downsample2d.1} parent=23 // pred_check
          %p215 = pneg %p59
        $region49: #{downsample2d.1} parent=23 // pred_check_branch
          %217 = sbr.rel (%p215) target = $region51
        $region50: #{downsample2d.1} parent=23 // pred_region
          %s218 = sand.u32 %s49, 1
          %s219 = sand.u32 %s49, 1
          %s220 = smul.addr %s219, 128
          %s221 = scalar_lea.vmem [#allocation3], %s220
          %s222 = smul.addr %s13, 32
          %s223 = sadd.s32 2, %s222
          %s224 = smul.addr %s223, 8
          %s225 = scalar_lea.vmem %s1, %s224
          // Predicated region
          $region52: #{downsample2d.1} parent=50 // pred_check
            _
          $region53: #{downsample2d.1} parent=50 // pred_check_branch
            %227 = sbr.rel (0) target = $region55
          $region54: #{downsample2d.1} parent=50 // pred_region
            // Predicated region
            $region56: #{downsample2d.1} parent=54 // pred_check
              _
            $region57: #{downsample2d.1} parent=54 // pred_check_branch
              %229 = sbr.rel (0) target = $region59
            $region58: #{downsample2d.1} parent=54 // pred_region
              loop: start=0, step=1, limit=1
              $region60: #{downsample2d.1} parent=58 // loop_pre_header
                _
              $region61: #{downsample2d.1} parent=58 // loop_header
                %s231 = sphi 0, %s235
                %p232 = scmp.ge.s32.totalorder %s231, 1
                %s236 = sphi %s225, %s225
                %s237 = sphi %s221, %s221
              $region62: #{downsample2d.1} parent=58 // loop_header_branch
                %234 = sbr.rel (%p232) target = $region66
              $region63: #{downsample2d.1} parent=58 // loop_body
                %v238 = vld [vmem:[%s236] sm:$0xff]
                %239 = vst [vmem:[%s237] sm:$0xff] %v238
                %v240 = vld [vmem:[%s236 + $0x8] sm:$0xff]
                %241 = vst [vmem:[%s237 + $0x8] sm:$0xff] %v240
                %v242 = vld [vmem:[%s236 + $0x20] sm:$0xff]
                %243 = vst [vmem:[%s237 + $0x10] sm:$0xff] %v242
                %v244 = vld [vmem:[%s236 + $0x28] sm:$0xff]
                %245 = vst [vmem:[%s237 + $0x18] sm:$0xff] %v244
                %v246 = vld [vmem:[%s236 + $0x40] sm:$0xff]
                %247 = vst [vmem:[%s237 + $0x20] sm:$0xff] %v246
                %v248 = vld [vmem:[%s236 + $0x48] sm:$0xff]
                %249 = vst [vmem:[%s237 + $0x28] sm:$0xff] %v248
                %v250 = vld [vmem:[%s236 + $0x60] sm:$0xff]
                %251 = vst [vmem:[%s237 + $0x30] sm:$0xff] %v250
                %v252 = vld [vmem:[%s236 + $0x68] sm:$0xff]
                %253 = vst [vmem:[%s237 + $0x38] sm:$0xff] %v252
                %v254 = vld [vmem:[%s236 + $0x80] sm:$0xff]
                %255 = vst [vmem:[%s237 + $0x40] sm:$0xff] %v254
                %v256 = vld [vmem:[%s236 + $0x88] sm:$0xff]
                %257 = vst [vmem:[%s237 + $0x48] sm:$0xff] %v256
                %v258 = vld [vmem:[%s236 + $0xa0] sm:$0xff]
                %259 = vst [vmem:[%s237 + $0x50] sm:$0xff] %v258
                %v260 = vld [vmem:[%s236 + $0xa8] sm:$0xff]
                %261 = vst [vmem:[%s237 + $0x58] sm:$0xff] %v260
                %v262 = vld [vmem:[%s236 + $0xc0] sm:$0xff]
                %263 = vst [vmem:[%s237 + $0x60] sm:$0xff] %v262
                %v264 = vld [vmem:[%s236 + $0xc8] sm:$0xff]
                %265 = vst [vmem:[%s237 + $0x68] sm:$0xff] %v264
                %v266 = vld [vmem:[%s236 + $0xe0] sm:$0xff]
                %267 = vst [vmem:[%s237 + $0x70] sm:$0xff] %v266
                %v268 = vld [vmem:[%s236 + $0xe8] sm:$0xff]
                %269 = vst [vmem:[%s237 + $0x78] sm:$0xff] %v268
              $region64: #{downsample2d.1} parent=58 // loop_footer
                %s235 = sadd.s32 1, %s231
              $region65: #{downsample2d.1} parent=58 // loop_footer_branch
                %230 = sbr.rel target = $region61
              $region66: #{downsample2d.1} parent=58 // loop_exit
                _
            $region59: #{downsample2d.1} parent=54 // pred_fallthru
              _
            // Predicated region
            $region67: #{downsample2d.1} parent=54 // pred_check
              _
            $region68: #{downsample2d.1} parent=54 // pred_check_branch
              %271 = sbr.rel target = $region70
            $region69: #{downsample2d.1} parent=54 // pred_region
              _
            $region70: #{downsample2d.1} parent=54 // pred_fallthru
              _
          $region55: #{downsample2d.1} parent=50 // pred_fallthru
            _
          %272 = vnop
        $region51: #{downsample2d.1} parent=23 // pred_fallthru
          _
      $region24: #{downsample2d.1} parent=5 // pred_fallthru
        _
      %p273 = scmp.le.s32.totalorder 1, %s13
      %p274 = scmp.lt.s32.totalorder %s13, 3
      %p275 = pnand %p273, %p274
      %p276 = pneg %p275
      // Predicated region
      $region71: #{downsample2d.1} parent=5 // pred_check
        _
      $region72: #{downsample2d.1} parent=5 // pred_check_branch
        %278 = sbr.rel (%p275) target = $region74
      $region73: #{downsample2d.1} parent=5 // pred_region
        %s279 = ssub.s32 %s13, 1
        %s280 = sand.u32 %s26, 1
        %s281 = sand.u32 %s26, 1
        %s282 = smul.addr %s281, 128
        %s283 = scalar_lea.vmem [#allocation2], %s282
        // Predicated region
        $region75: #{downsample2d.1} parent=73 // pred_check
          %p284 = pneg %p39
        $region76: #{downsample2d.1} parent=73 // pred_check_branch
          %286 = sbr.rel (%p284) target = $region78
        $region77: #{downsample2d.1} parent=73 // pred_region
          _
        $region78: #{downsample2d.1} parent=73 // pred_fallthru
          _
        %s287 = sand.u32 %s52, 1
        %s288 = sand.u32 %s52, 1
        %s289 = smul.addr %s288, 128
        %s290 = scalar_lea.vmem [#allocation3], %s289
        // Predicated region
        $region79: #{downsample2d.1} parent=73 // pred_check
          %p291 = pneg %p65
        $region80: #{downsample2d.1} parent=73 // pred_check_branch
          %293 = sbr.rel (%p291) target = $region82
        $region81: #{downsample2d.1} parent=73 // pred_region
          _
        $region82: #{downsample2d.1} parent=73 // pred_fallthru
          _
        %s294 = sand.u32 %s26, 1
        %s295 = sand.u32 %s26, 1
        %s296 = smul.addr %s295, 128
        %s297 = scalar_lea.vmem [#allocation2], %s296
        %p298 = pneg %p39
        %p299 = pneg %p36
        %s300 = sand.u32 %s52, 1
        %s301 = sand.u32 %s52, 1
        %s302 = smul.addr %s301, 128
        %s303 = scalar_lea.vmem [#allocation3], %s302
        %p304 = pneg %p65
        %p305 = pneg %p62
        %p306 = pneg %p86
        %p307 = pneg %p83
        %p308 = pneg %p107
        %p309 = pneg %p104
        %p310 = pneg %p133
        %p311 = pneg %p130
        %s312 = sand.u32 %s120, 1
        %s313 = scalar_lea.sflag [#allocation5], %s312
        %s314 = sand.u32 %s120, 1
        %s315 = smul.addr %s314, 64
        %s316 = scalar_lea.vmem [#allocation4], %s315
        %v317 = vld [vmem:[%s283] sm:$0xff]
        %v318 = vld [vmem:[%s283 + $0x8] sm:$0xff]
        %v319 = vld [vmem:[%s283 + $0x10] sm:$0xff]
        %v320 = vld [vmem:[%s283 + $0x18] sm:$0xff]
        %v321 = vld [vmem:[%s283 + $0x20] sm:$0xff]
        %v322 = vld [vmem:[%s283 + $0x28] sm:$0xff]
        %v323 = vld [vmem:[%s283 + $0x30] sm:$0xff]
        %v324 = vld [vmem:[%s283 + $0x38] sm:$0xff]
        %v325 = vld [vmem:[%s283 + $0x40] sm:$0xff]
        %v326 = vld [vmem:[%s283 + $0x48] sm:$0xff]
        %v327 = vld [vmem:[%s283 + $0x50] sm:$0xff]
        %v328 = vld [vmem:[%s283 + $0x58] sm:$0xff]
        %v329 = vld [vmem:[%s283 + $0x60] sm:$0xff]
        %v330 = vld [vmem:[%s283 + $0x68] sm:$0xff]
        %v331 = vld [vmem:[%s283 + $0x70] sm:$0xff]
        %v332 = vld [vmem:[%s283 + $0x78] sm:$0xff]
        %v333 = vpack.c.bf16 %v318, %v317
        %v334 = vpack.c.bf16 %v320, %v319
        %v335 = vpack.c.bf16 %v322, %v321
        %v336 = vpack.c.bf16 %v324, %v323
        %v337 = vpack.c.bf16 %v326, %v325
        %v338 = vpack.c.bf16 %v328, %v327
        %v339 = vpack.c.bf16 %v330, %v329
        %v340 = vpack.c.bf16 %v332, %v331
        %v341 = vld [vmem:[%s290] sm:$0xff]
        %v342 = vld [vmem:[%s290 + $0x8] sm:$0xff]
        %v343 = vld [vmem:[%s290 + $0x10] sm:$0xff]
        %v344 = vld [vmem:[%s290 + $0x18] sm:$0xff]
        %v345 = vld [vmem:[%s290 + $0x20] sm:$0xff]
        %v346 = vld [vmem:[%s290 + $0x28] sm:$0xff]
        %v347 = vld [vmem:[%s290 + $0x30] sm:$0xff]
        %v348 = vld [vmem:[%s290 + $0x38] sm:$0xff]
        %v349 = vld [vmem:[%s290 + $0x40] sm:$0xff]
        %v350 = vld [vmem:[%s290 + $0x48] sm:$0xff]
        %v351 = vld [vmem:[%s290 + $0x50] sm:$0xff]
        %v352 = vld [vmem:[%s290 + $0x58] sm:$0xff]
        %v353 = vld [vmem:[%s290 + $0x60] sm:$0xff]
        %v354 = vld [vmem:[%s290 + $0x68] sm:$0xff]
        %v355 = vld [vmem:[%s290 + $0x70] sm:$0xff]
        %v356 = vld [vmem:[%s290 + $0x78] sm:$0xff]
        %v357 = vpack.c.bf16 %v342, %v341
        %v358 = vpack.c.bf16 %v344, %v343
        %v359 = vpack.c.bf16 %v346, %v345
        %v360 = vpack.c.bf16 %v348, %v347
        %v361 = vpack.c.bf16 %v350, %v349
        %v362 = vpack.c.bf16 %v352, %v351
        %v363 = vpack.c.bf16 %v354, %v353
        %v364 = vpack.c.bf16 %v356, %v355
        %v365 = vld [vmem:[%s2] sm:$0xff]
        %v366 = vld [vmem:[%s2 + $0x8] sm:$0xff]
        %v367 = vld [vmem:[%s2 + $0x10] sm:$0xff]
        %v368 = vld [vmem:[%s2 + $0x18] sm:$0xff]
        %v369 = vld [vmem:[%s2 + $0x20] sm:$0xff]
        %v370 = vld [vmem:[%s2 + $0x28] sm:$0xff]
        %v371 = vld [vmem:[%s2 + $0x30] sm:$0xff]
        %v372 = vld [vmem:[%s2 + $0x38] sm:$0xff]
        %v373 = vld [vmem:[%s2 + $0x40] sm:$0xff]
        %v374 = vld [vmem:[%s2 + $0x48] sm:$0xff]
        %v375 = vld [vmem:[%s2 + $0x50] sm:$0xff]
        %v376 = vld [vmem:[%s2 + $0x58] sm:$0xff]
        %v377 = vld [vmem:[%s2 + $0x60] sm:$0xff]
        %v378 = vld [vmem:[%s2 + $0x68] sm:$0xff]
        %v379 = vld [vmem:[%s2 + $0x70] sm:$0xff]
        %v380 = vld [vmem:[%s2 + $0x78] sm:$0xff]
        %v381 = vld [vmem:[%s2 + $0x80] sm:$0xff]
        %v382 = vld [vmem:[%s2 + $0x88] sm:$0xff]
        %v383 = vld [vmem:[%s2 + $0x90] sm:$0xff]
        %v384 = vld [vmem:[%s2 + $0x98] sm:$0xff]
        %v385 = vld [vmem:[%s2 + $0xa0] sm:$0xff]
        %v386 = vld [vmem:[%s2 + $0xa8] sm:$0xff]
        %v387 = vld [vmem:[%s2 + $0xb0] sm:$0xff]
        %v388 = vld [vmem:[%s2 + $0xb8] sm:$0xff]
        %v389 = vld [vmem:[%s2 + $0xc0] sm:$0xff]
        %v390 = vld [vmem:[%s2 + $0xc8] sm:$0xff]
        %v391 = vld [vmem:[%s2 + $0xd0] sm:$0xff]
        %v392 = vld [vmem:[%s2 + $0xd8] sm:$0xff]
        %v393 = vld [vmem:[%s2 + $0xe0] sm:$0xff]
        %v394 = vld [vmem:[%s2 + $0xe8] sm:$0xff]
        %v395 = vld [vmem:[%s2 + $0xf0] sm:$0xff]
        %v396 = vld [vmem:[%s2 + $0xf8] sm:$0xff]
        %v397 = vld [vmem:[%s2 + $0x100] sm:$0xff]
        %v398 = vld [vmem:[%s2 + $0x108] sm:$0xff]
        %v399 = vld [vmem:[%s2 + $0x110] sm:$0xff]
        %v400 = vld [vmem:[%s2 + $0x118] sm:$0xff]
        %v401 = vld [vmem:[%s2 + $0x120] sm:$0xff]
        %v402 = vld [vmem:[%s2 + $0x128] sm:$0xff]
        %v403 = vld [vmem:[%s2 + $0x130] sm:$0xff]
        %v404 = vld [vmem:[%s2 + $0x138] sm:$0xff]
        %v405 = vld [vmem:[%s2 + $0x140] sm:$0xff]
        %v406 = vld [vmem:[%s2 + $0x148] sm:$0xff]
        %v407 = vld [vmem:[%s2 + $0x150] sm:$0xff]
        %v408 = vld [vmem:[%s2 + $0x158] sm:$0xff]
        %v409 = vld [vmem:[%s2 + $0x160] sm:$0xff]
        %v410 = vld [vmem:[%s2 + $0x168] sm:$0xff]
        %v411 = vld [vmem:[%s2 + $0x170] sm:$0xff]
        %v412 = vld [vmem:[%s2 + $0x178] sm:$0xff]
        %v413 = vld [vmem:[%s2 + $0x180] sm:$0xff]
        %v414 = vld [vmem:[%s2 + $0x188] sm:$0xff]
        %v415 = vld [vmem:[%s2 + $0x190] sm:$0xff]
        %v416 = vld [vmem:[%s2 + $0x198] sm:$0xff]
        %v417 = vld [vmem:[%s2 + $0x1a0] sm:$0xff]
        %v418 = vld [vmem:[%s2 + $0x1a8] sm:$0xff]
        %v419 = vld [vmem:[%s2 + $0x1b0] sm:$0xff]
        %v420 = vld [vmem:[%s2 + $0x1b8] sm:$0xff]
        %v421 = vld [vmem:[%s2 + $0x1c0] sm:$0xff]
        %v422 = vld [vmem:[%s2 + $0x1c8] sm:$0xff]
        %v423 = vld [vmem:[%s2 + $0x1d0] sm:$0xff]
        %v424 = vld [vmem:[%s2 + $0x1d8] sm:$0xff]
        %v425 = vld [vmem:[%s2 + $0x1e0] sm:$0xff]
        %v426 = vld [vmem:[%s2 + $0x1e8] sm:$0xff]
        %v427 = vld [vmem:[%s2 + $0x1f0] sm:$0xff]
        %v428 = vld [vmem:[%s2 + $0x1f8] sm:$0xff]
        %v429 = vld [vmem:[%s2 + $0x200] sm:$0xff]
        %v430 = vld [vmem:[%s2 + $0x208] sm:$0xff]
        %v431 = vld [vmem:[%s2 + $0x210] sm:$0xff]
        %v432 = vld [vmem:[%s2 + $0x218] sm:$0xff]
        %v433 = vld [vmem:[%s2 + $0x220] sm:$0xff]
        %v434 = vld [vmem:[%s2 + $0x228] sm:$0xff]
        %v435 = vld [vmem:[%s2 + $0x230] sm:$0xff]
        %v436 = vld [vmem:[%s2 + $0x238] sm:$0xff]
        %v437 = vld [vmem:[%s2 + $0x240] sm:$0xff]
        %v438 = vld [vmem:[%s2 + $0x248] sm:$0xff]
        %v439 = vld [vmem:[%s2 + $0x250] sm:$0xff]
        %v440 = vld [vmem:[%s2 + $0x258] sm:$0xff]
        %v441 = vld [vmem:[%s2 + $0x260] sm:$0xff]
        %v442 = vld [vmem:[%s2 + $0x268] sm:$0xff]
        %v443 = vld [vmem:[%s2 + $0x270] sm:$0xff]
        %v444 = vld [vmem:[%s2 + $0x278] sm:$0xff]
        %v445 = vld [vmem:[%s2 + $0x280] sm:$0xff]
        %v446 = vld [vmem:[%s2 + $0x288] sm:$0xff]
        %v447 = vld [vmem:[%s2 + $0x290] sm:$0xff]
        %v448 = vld [vmem:[%s2 + $0x298] sm:$0xff]
        %v449 = vld [vmem:[%s2 + $0x2a0] sm:$0xff]
        %v450 = vld [vmem:[%s2 + $0x2a8] sm:$0xff]
        %v451 = vld [vmem:[%s2 + $0x2b0] sm:$0xff]
        %v452 = vld [vmem:[%s2 + $0x2b8] sm:$0xff]
        %v453 = vld [vmem:[%s2 + $0x2c0] sm:$0xff]
        %v454 = vld [vmem:[%s2 + $0x2c8] sm:$0xff]
        %v455 = vld [vmem:[%s2 + $0x2d0] sm:$0xff]
        %v456 = vld [vmem:[%s2 + $0x2d8] sm:$0xff]
        %v457 = vld [vmem:[%s2 + $0x2e0] sm:$0xff]
        %v458 = vld [vmem:[%s2 + $0x2e8] sm:$0xff]
        %v459 = vld [vmem:[%s2 + $0x2f0] sm:$0xff]
        %v460 = vld [vmem:[%s2 + $0x2f8] sm:$0xff]
        %v461 = vld [vmem:[%s2 + $0x300] sm:$0xff]
        %v462 = vld [vmem:[%s2 + $0x308] sm:$0xff]
        %v463 = vld [vmem:[%s2 + $0x310] sm:$0xff]
        %v464 = vld [vmem:[%s2 + $0x318] sm:$0xff]
        %v465 = vld [vmem:[%s2 + $0x320] sm:$0xff]
        %v466 = vld [vmem:[%s2 + $0x328] sm:$0xff]
        %v467 = vld [vmem:[%s2 + $0x330] sm:$0xff]
        %v468 = vld [vmem:[%s2 + $0x338] sm:$0xff]
        %v469 = vld [vmem:[%s2 + $0x340] sm:$0xff]
        %v470 = vld [vmem:[%s2 + $0x348] sm:$0xff]
        %v471 = vld [vmem:[%s2 + $0x350] sm:$0xff]
        %v472 = vld [vmem:[%s2 + $0x358] sm:$0xff]
        %v473 = vld [vmem:[%s2 + $0x360] sm:$0xff]
        %v474 = vld [vmem:[%s2 + $0x368] sm:$0xff]
        %v475 = vld [vmem:[%s2 + $0x370] sm:$0xff]
        %v476 = vld [vmem:[%s2 + $0x378] sm:$0xff]
        %v477 = vld [vmem:[%s2 + $0x380] sm:$0xff]
        %v478 = vld [vmem:[%s2 + $0x388] sm:$0xff]
        %v479 = vld [vmem:[%s2 + $0x390] sm:$0xff]
        %v480 = vld [vmem:[%s2 + $0x398] sm:$0xff]
        %v481 = vld [vmem:[%s2 + $0x3a0] sm:$0xff]
        %v482 = vld [vmem:[%s2 + $0x3a8] sm:$0xff]
        %v483 = vld [vmem:[%s2 + $0x3b0] sm:$0xff]
        %v484 = vld [vmem:[%s2 + $0x3b8] sm:$0xff]
        %v485 = vld [vmem:[%s2 + $0x3c0] sm:$0xff]
        %v486 = vld [vmem:[%s2 + $0x3c8] sm:$0xff]
        %v487 = vld [vmem:[%s2 + $0x3d0] sm:$0xff]
        %v488 = vld [vmem:[%s2 + $0x3d8] sm:$0xff]
        %v489 = vld [vmem:[%s2 + $0x3e0] sm:$0xff]
        %v490 = vld [vmem:[%s2 + $0x3e8] sm:$0xff]
        %v491 = vld [vmem:[%s2 + $0x3f0] sm:$0xff]
        %v492 = vld [vmem:[%s2 + $0x3f8] sm:$0xff]
        %v493 = vld [vmem:[%s2 + $0x400] sm:$0xff]
        %v494 = vld [vmem:[%s2 + $0x408] sm:$0xff]
        %v495 = vld [vmem:[%s2 + $0x410] sm:$0xff]
        %v496 = vld [vmem:[%s2 + $0x418] sm:$0xff]
        %v497 = vld [vmem:[%s2 + $0x420] sm:$0xff]
        %v498 = vld [vmem:[%s2 + $0x428] sm:$0xff]
        %v499 = vld [vmem:[%s2 + $0x430] sm:$0xff]
        %v500 = vld [vmem:[%s2 + $0x438] sm:$0xff]
        %v501 = vld [vmem:[%s2 + $0x440] sm:$0xff]
        %v502 = vld [vmem:[%s2 + $0x448] sm:$0xff]
        %v503 = vld [vmem:[%s2 + $0x450] sm:$0xff]
        %v504 = vld [vmem:[%s2 + $0x458] sm:$0xff]
        %v505 = vld [vmem:[%s2 + $0x460] sm:$0xff]
        %v506 = vld [vmem:[%s2 + $0x468] sm:$0xff]
        %v507 = vld [vmem:[%s2 + $0x470] sm:$0xff]
        %v508 = vld [vmem:[%s2 + $0x478] sm:$0xff]
        %v509 = vpack.c.bf16 %v365, %v365
        %v510 = vpack.c.bf16 %v366, %v366
        %v511 = vpack.c.bf16 %v367, %v367
        %v512 = vpack.c.bf16 %v368, %v368
        %v513 = vpack.c.bf16 %v369, %v369
        %v514 = vpack.c.bf16 %v370, %v370
        %v515 = vpack.c.bf16 %v371, %v371
        %v516 = vpack.c.bf16 %v372, %v372
        %v517 = vpack.c.bf16 %v373, %v373
        %v518 = vpack.c.bf16 %v374, %v374
        %v519 = vpack.c.bf16 %v375, %v375
        %v520 = vpack.c.bf16 %v376, %v376
        %v521 = vpack.c.bf16 %v377, %v377
        %v522 = vpack.c.bf16 %v378, %v378
        %v523 = vpack.c.bf16 %v379, %v379
        %v524 = vpack.c.bf16 %v380, %v380
        %v525 = vpack.c.bf16 %v381, %v381
        %v526 = vpack.c.bf16 %v382, %v382
        %v527 = vpack.c.bf16 %v383, %v383
        %v528 = vpack.c.bf16 %v384, %v384
        %v529 = vpack.c.bf16 %v385, %v385
        %v530 = vpack.c.bf16 %v386, %v386
        %v531 = vpack.c.bf16 %v387, %v387
        %v532 = vpack.c.bf16 %v388, %v388
        %v533 = vpack.c.bf16 %v389, %v389
        %v534 = vpack.c.bf16 %v390, %v390
        %v535 = vpack.c.bf16 %v391, %v391
        %v536 = vpack.c.bf16 %v392, %v392
        %v537 = vpack.c.bf16 %v393, %v393
        %v538 = vpack.c.bf16 %v394, %v394
        %v539 = vpack.c.bf16 %v395, %v395
        %v540 = vpack.c.bf16 %v396, %v396
        %v541 = vpack.c.bf16 %v397, %v397
        %v542 = vpack.c.bf16 %v398, %v398
        %v543 = vpack.c.bf16 %v399, %v399
        %v544 = vpack.c.bf16 %v400, %v400
        %v545 = vpack.c.bf16 %v401, %v401
        %v546 = vpack.c.bf16 %v402, %v402
        %v547 = vpack.c.bf16 %v403, %v403
        %v548 = vpack.c.bf16 %v404, %v404
        %v549 = vpack.c.bf16 %v405, %v405
        %v550 = vpack.c.bf16 %v406, %v406
        %v551 = vpack.c.bf16 %v407, %v407
        %v552 = vpack.c.bf16 %v408, %v408
        %v553 = vpack.c.bf16 %v409, %v409
        %v554 = vpack.c.bf16 %v410, %v410
        %v555 = vpack.c.bf16 %v411, %v411
        %v556 = vpack.c.bf16 %v412, %v412
        %v557 = vpack.c.bf16 %v413, %v413
        %v558 = vpack.c.bf16 %v414, %v414
        %v559 = vpack.c.bf16 %v415, %v415
        %v560 = vpack.c.bf16 %v416, %v416
        %v561 = vpack.c.bf16 %v417, %v417
        %v562 = vpack.c.bf16 %v418, %v418
        %v563 = vpack.c.bf16 %v419, %v419
        %v564 = vpack.c.bf16 %v420, %v420
        %v565 = vpack.c.bf16 %v421, %v421
        %v566 = vpack.c.bf16 %v422, %v422
        %v567 = vpack.c.bf16 %v423, %v423
        %v568 = vpack.c.bf16 %v424, %v424
        %v569 = vpack.c.bf16 %v425, %v425
        %v570 = vpack.c.bf16 %v426, %v426
        %v571 = vpack.c.bf16 %v427, %v427
        %v572 = vpack.c.bf16 %v428, %v428
        %v573 = vpack.c.bf16 %v429, %v429
        %v574 = vpack.c.bf16 %v430, %v430
        %v575 = vpack.c.bf16 %v431, %v431
        %v576 = vpack.c.bf16 %v432, %v432
        %v577 = vpack.c.bf16 %v433, %v433
        %v578 = vpack.c.bf16 %v434, %v434
        %v579 = vpack.c.bf16 %v435, %v435
        %v580 = vpack.c.bf16 %v436, %v436
        %v581 = vpack.c.bf16 %v437, %v437
        %v582 = vpack.c.bf16 %v438, %v438
        %v583 = vpack.c.bf16 %v439, %v439
        %v584 = vpack.c.bf16 %v440, %v440
        %v585 = vpack.c.bf16 %v441, %v441
        %v586 = vpack.c.bf16 %v442, %v442
        %v587 = vpack.c.bf16 %v443, %v443
        %v588 = vpack.c.bf16 %v444, %v444
        %v589 = vpack.c.bf16 %v445, %v445
        %v590 = vpack.c.bf16 %v446, %v446
        %v591 = vpack.c.bf16 %v447, %v447
        %v592 = vpack.c.bf16 %v448, %v448
        %v593 = vpack.c.bf16 %v449, %v449
        %v594 = vpack.c.bf16 %v450, %v450
        %v595 = vpack.c.bf16 %v451, %v451
        %v596 = vpack.c.bf16 %v452, %v452
        %v597 = vpack.c.bf16 %v453, %v453
        %v598 = vpack.c.bf16 %v454, %v454
        %v599 = vpack.c.bf16 %v455, %v455
        %v600 = vpack.c.bf16 %v456, %v456
        %v601 = vpack.c.bf16 %v457, %v457
        %v602 = vpack.c.bf16 %v458, %v458
        %v603 = vpack.c.bf16 %v459, %v459
        %v604 = vpack.c.bf16 %v460, %v460
        %v605 = vpack.c.bf16 %v461, %v461
        %v606 = vpack.c.bf16 %v462, %v462
        %v607 = vpack.c.bf16 %v463, %v463
        %v608 = vpack.c.bf16 %v464, %v464
        %v609 = vpack.c.bf16 %v465, %v465
        %v610 = vpack.c.bf16 %v466, %v466
        %v611 = vpack.c.bf16 %v467, %v467
        %v612 = vpack.c.bf16 %v468, %v468
        %v613 = vpack.c.bf16 %v469, %v469
        %v614 = vpack.c.bf16 %v470, %v470
        %v615 = vpack.c.bf16 %v471, %v471
        %v616 = vpack.c.bf16 %v472, %v472
        %v617 = vpack.c.bf16 %v473, %v473
        %v618 = vpack.c.bf16 %v474, %v474
        %v619 = vpack.c.bf16 %v475, %v475
        %v620 = vpack.c.bf16 %v476, %v476
        %v621 = vpack.c.bf16 %v477, %v477
        %v622 = vpack.c.bf16 %v478, %v478
        %v623 = vpack.c.bf16 %v479, %v479
        %v624 = vpack.c.bf16 %v480, %v480
        %v625 = vpack.c.bf16 %v481, %v481
        %v626 = vpack.c.bf16 %v482, %v482
        %v627 = vpack.c.bf16 %v483, %v483
        %v628 = vpack.c.bf16 %v484, %v484
        %v629 = vpack.c.bf16 %v485, %v485
        %v630 = vpack.c.bf16 %v486, %v486
        %v631 = vpack.c.bf16 %v487, %v487
        %v632 = vpack.c.bf16 %v488, %v488
        %v633 = vpack.c.bf16 %v489, %v489
        %v634 = vpack.c.bf16 %v490, %v490
        %v635 = vpack.c.bf16 %v491, %v491
        %v636 = vpack.c.bf16 %v492, %v492
        %v637 = vpack.c.bf16 %v493, %v493
        %v638 = vpack.c.bf16 %v494, %v494
        %v639 = vpack.c.bf16 %v495, %v495
        %v640 = vpack.c.bf16 %v496, %v496
        %v641 = vpack.c.bf16 %v497, %v497
        %v642 = vpack.c.bf16 %v498, %v498
        %v643 = vpack.c.bf16 %v499, %v499
        %v644 = vpack.c.bf16 %v500, %v500
        %v645 = vpack.c.bf16 %v501, %v501
        %v646 = vpack.c.bf16 %v502, %v502
        %v647 = vpack.c.bf16 %v503, %v503
        %v648 = vpack.c.bf16 %v504, %v504
        %v649 = vpack.c.bf16 %v505, %v505
        %v650 = vpack.c.bf16 %v506, %v506
        %v651 = vpack.c.bf16 %v507, %v507
        %v652 = vpack.c.bf16 %v508, %v508
        %v653 = vlaneseq
        %v654 = vshrl.u32 %v653, 7
        %v655 = vadd.s32 %v654, 8
        %v656 = vadd.s32 %v654, 16
        %v657 = vadd.s32 %v654, 24
        %v658 = vadd.s32 %v654, 32
        %v659 = vadd.s32 %v654, 40
        %v660 = vadd.s32 %v654, 48
        %v661 = vadd.s32 %v654, 56
        %vm662 = vcmp.lt.s32.totalorder %v654, 0
        %v663 = vsub.s32 0, %v654
        %v664 = vsel %vm662, %v663, %v654
        %v665 = vshrl.u32 %v664, 3
        %v666 = vand.u32 %v664, 7
        %v667 = vsub.s32 0, %v666
        %v668 = vsel %vm662, %v667, %v666
        %vm669 = vcmp.lt.s32.totalorder %v655, 0
        %v670 = vsub.s32 0, %v655
        %v671 = vsel %vm669, %v670, %v655
        %v672 = vshrl.u32 %v671, 3
        %v673 = vand.u32 %v671, 7
        %v674 = vsub.s32 0, %v673
        %v675 = vsel %vm669, %v674, %v673
        %vm676 = vcmp.lt.s32.totalorder %v656, 0
        %v677 = vsub.s32 0, %v656
        %v678 = vsel %vm676, %v677, %v656
        %v679 = vshrl.u32 %v678, 3
        %v680 = vand.u32 %v678, 7
        %v681 = vsub.s32 0, %v680
        %v682 = vsel %vm676, %v681, %v680
        %vm683 = vcmp.lt.s32.totalorder %v657, 0
        %v684 = vsub.s32 0, %v657
        %v685 = vsel %vm683, %v684, %v657
        %v686 = vshrl.u32 %v685, 3
        %v687 = vand.u32 %v685, 7
        %v688 = vsub.s32 0, %v687
        %v689 = vsel %vm683, %v688, %v687
        %vm690 = vcmp.lt.s32.totalorder %v658, 0
        %v691 = vsub.s32 0, %v658
        %v692 = vsel %vm690, %v691, %v658
        %v693 = vshrl.u32 %v692, 3
        %v694 = vand.u32 %v692, 7
        %v695 = vsub.s32 0, %v694
        %v696 = vsel %vm690, %v695, %v694
        %vm697 = vcmp.lt.s32.totalorder %v659, 0
        %v698 = vsub.s32 0, %v659
        %v699 = vsel %vm697, %v698, %v659
        %v700 = vshrl.u32 %v699, 3
        %v701 = vand.u32 %v699, 7
        %v702 = vsub.s32 0, %v701
        %v703 = vsel %vm697, %v702, %v701
        %vm704 = vcmp.lt.s32.totalorder %v660, 0
        %v705 = vsub.s32 0, %v660
        %v706 = vsel %vm704, %v705, %v660
        %v707 = vshrl.u32 %v706, 3
        %v708 = vand.u32 %v706, 7
        %v709 = vsub.s32 0, %v708
        %v710 = vsel %vm704, %v709, %v708
        %vm711 = vcmp.lt.s32.totalorder %v661, 0
        %v712 = vsub.s32 0, %v661
        %v713 = vsel %vm711, %v712, %v661
        %v714 = vshrl.u32 %v713, 3
        %v715 = vand.u32 %v713, 7
        %v716 = vsub.s32 0, %v715
        %v717 = vsel %vm711, %v716, %v715
        %vm718 = vcmp.ne.s32.totalorder %v668, 0
        %vm719 = vcmp.ne.s32.totalorder %v675, 0
        %vm720 = vcmp.ne.s32.totalorder %v682, 0
        %vm721 = vcmp.ne.s32.totalorder %v689, 0
        %vm722 = vcmp.ne.s32.totalorder %v696, 0
        %vm723 = vcmp.ne.s32.totalorder %v703, 0
        %vm724 = vcmp.ne.s32.totalorder %v710, 0
        %vm725 = vcmp.ne.s32.totalorder %v717, 0
        %vm726 = vcmp.lt.s32.totalorder %v668, 0
        %vm727 = vcmp.lt.s32.totalorder %v675, 0
        %vm728 = vcmp.lt.s32.totalorder %v682, 0
        %vm729 = vcmp.lt.s32.totalorder %v689, 0
        %vm730 = vcmp.lt.s32.totalorder %v696, 0
        %vm731 = vcmp.lt.s32.totalorder %v703, 0
        %vm732 = vcmp.lt.s32.totalorder %v710, 0
        %vm733 = vcmp.lt.s32.totalorder %v717, 0
        %vm734 = vmand %vm726, %vm718
        %vm735 = vmand %vm727, %vm719
        %vm736 = vmand %vm728, %vm720
        %vm737 = vmand %vm729, %vm721
        %vm738 = vmand %vm730, %vm722
        %vm739 = vmand %vm731, %vm723
        %vm740 = vmand %vm732, %vm724
        %vm741 = vmand %vm733, %vm725
        %v742 = vadd.s32 %v668, 8
        %v743 = vadd.s32 %v675, 8
        %v744 = vadd.s32 %v682, 8
        %v745 = vadd.s32 %v689, 8
        %v746 = vadd.s32 %v696, 8
        %v747 = vadd.s32 %v703, 8
        %v748 = vadd.s32 %v710, 8
        %v749 = vadd.s32 %v717, 8
        %v750 = vsel %vm734, %v742, %v668
        %v751 = vsel %vm735, %v743, %v675
        %v752 = vsel %vm736, %v744, %v682
        %v753 = vsel %vm737, %v745, %v689
        %v754 = vsel %vm738, %v746, %v696
        %v755 = vsel %vm739, %v747, %v703
        %v756 = vsel %vm740, %v748, %v710
        %v757 = vsel %vm741, %v749, %v717
        %vm758 = vcmp.ne.s32.totalorder %v750, 0
        %vm759 = vcmp.ne.s32.totalorder %v751, 0
        %vm760 = vcmp.ne.s32.totalorder %v752, 0
        %vm761 = vcmp.ne.s32.totalorder %v753, 0
        %vm762 = vcmp.ne.s32.totalorder %v754, 0
        %vm763 = vcmp.ne.s32.totalorder %v755, 0
        %vm764 = vcmp.ne.s32.totalorder %v756, 0
        %vm765 = vcmp.ne.s32.totalorder %v757, 0
        %v774 = vunpack.c.l.b16 %v357
        %v775 = vunpack.c.h.b16 %v357
        %v776 = vunpack.c.l.b16 %v358
        %v777 = vunpack.c.h.b16 %v358
        %v778 = vunpack.c.l.b16 %v359
        %v779 = vunpack.c.h.b16 %v359
        %v780 = vunpack.c.l.b16 %v360
        %v781 = vunpack.c.h.b16 %v360
        %v782 = vunpack.c.l.b16 %v361
        %v783 = vunpack.c.h.b16 %v361
        %v784 = vunpack.c.l.b16 %v362
        %v785 = vunpack.c.h.b16 %v362
        %v786 = vunpack.c.l.b16 %v363
        %v787 = vunpack.c.h.b16 %v363
        %v788 = vunpack.c.l.b16 %v364
        %v789 = vunpack.c.h.b16 %v364
        %v790 = vpack.c.b16 %v776, %v774
        %v791 = vpack.c.b16 %v777, %v775
        %v792 = vpack.c.b16 %v780, %v778
        %v793 = vpack.c.b16 %v781, %v779
        %v794 = vpack.c.b16 %v784, %v782
        %v795 = vpack.c.b16 %v785, %v783
        %v796 = vpack.c.b16 %v788, %v786
        %v797 = vpack.c.b16 %v789, %v787
        %v838 = vunpack.c.l.b16 %v541
        %v839 = vunpack.c.l.b16 %v542
        %v840 = vunpack.c.l.b16 %v543
        %v841 = vunpack.c.l.b16 %v544
        %v842 = vunpack.c.l.b16 %v545
        %v843 = vunpack.c.l.b16 %v546
        %v844 = vunpack.c.l.b16 %v547
        %v845 = vunpack.c.l.b16 %v548
        %v846 = vunpack.c.l.b16 %v549
        %v847 = vunpack.c.l.b16 %v550
        %v848 = vunpack.c.l.b16 %v551
        %v849 = vunpack.c.l.b16 %v552
        %v850 = vunpack.c.l.b16 %v553
        %v851 = vunpack.c.l.b16 %v554
        %v852 = vunpack.c.l.b16 %v555
        %v853 = vunpack.c.l.b16 %v556
        %v854 = vunpack.c.l.b16 %v557
        %v855 = vunpack.c.l.b16 %v558
        %v856 = vunpack.c.l.b16 %v559
        %v857 = vunpack.c.l.b16 %v560
        %v858 = vunpack.c.l.b16 %v561
        %v859 = vunpack.c.l.b16 %v562
        %v860 = vunpack.c.l.b16 %v563
        %v861 = vunpack.c.l.b16 %v564
        %v862 = vunpack.c.l.b16 %v565
        %v863 = vunpack.c.l.b16 %v566
        %v864 = vunpack.c.l.b16 %v567
        %v865 = vunpack.c.l.b16 %v568
        %v866 = vunpack.c.l.b16 %v569
        %v867 = vunpack.c.l.b16 %v570
        %v868 = vunpack.c.l.b16 %v571
        %v869 = vunpack.c.l.b16 %v572
        %v870 = vpack.c.b16 %v839, %v838
        %v871 = vpack.c.b16 %v841, %v840
        %v872 = vpack.c.b16 %v843, %v842
        %v873 = vpack.c.b16 %v845, %v844
        %v874 = vpack.c.b16 %v847, %v846
        %v875 = vpack.c.b16 %v849, %v848
        %v876 = vpack.c.b16 %v851, %v850
        %v877 = vpack.c.b16 %v853, %v852
        %v878 = vpack.c.b16 %v855, %v854
        %v879 = vpack.c.b16 %v857, %v856
        %v880 = vpack.c.b16 %v859, %v858
        %v881 = vpack.c.b16 %v861, %v860
        %v882 = vpack.c.b16 %v863, %v862
        %v883 = vpack.c.b16 %v865, %v864
        %v884 = vpack.c.b16 %v867, %v866
        %v885 = vpack.c.b16 %v869, %v868
        %902 = vmatpush.bf16.msra.mxu0 %v877
        %903 = vmatpush.bf16.msra.mxu0 %v876
        %904 = vmatpush.bf16.msra.mxu0 %v875
        %905 = vmatpush.bf16.msra.mxu0 %v874
        %906 = vmatpush.bf16.msra.mxu0 %v873
        %907 = vmatpush.bf16.msra.mxu0 %v872
        %908 = vmatpush.bf16.msra.mxu0 %v871
        %909 = vmatpush.bf16.msra.mxu0 %v870
        %910 = vmatmul.bf16.gmra.mxu0 %v790
        %v911 = vpop.f32.mrf.mxu0
        %v912 = vadd.f32 0.0, %v911
        %v913 = vpop.f32.mrf.mxu0
        %v914 = vadd.f32 0.0, %v913
        %915 = vmatmul.bf16.gmra.mxu0 %v792
        %v916 = vpop.f32.mrf.mxu0
        %v917 = vadd.f32 0.0, %v916
        %v918 = vpop.f32.mrf.mxu0
        %v919 = vadd.f32 0.0, %v918
        %920 = vmatmul.bf16.gmra.mxu0 %v794
        %v921 = vpop.f32.mrf.mxu0
        %v922 = vadd.f32 0.0, %v921
        %v923 = vpop.f32.mrf.mxu0
        %v924 = vadd.f32 0.0, %v923
        %925 = vmatmul.bf16.gmra.mxu0 %v796
        %v926 = vpop.f32.mrf.mxu0
        %v927 = vadd.f32 0.0, %v926
        %v928 = vpop.f32.mrf.mxu0
        %v929 = vadd.f32 0.0, %v928
        %930 = vdwg.mxu0
        %931 = vmatpush.bf16.msra.mxu0 %v885
        %932 = vmatpush.bf16.msra.mxu0 %v884
        %933 = vmatpush.bf16.msra.mxu0 %v883
        %934 = vmatpush.bf16.msra.mxu0 %v882
        %935 = vmatpush.bf16.msra.mxu0 %v881
        %936 = vmatpush.bf16.msra.mxu0 %v880
        %937 = vmatpush.bf16.msra.mxu0 %v879
        %938 = vmatpush.bf16.msra.mxu0 %v878
        %939 = vmatmul.bf16.gmra.mxu0 %v791
        %v940 = vpop.f32.mrf.mxu0
        %v941 = vadd.f32 %v912, %v940
        %v942 = vpop.f32.mrf.mxu0
        %v943 = vadd.f32 %v914, %v942
        %944 = vmatmul.bf16.gmra.mxu0 %v793
        %v945 = vpop.f32.mrf.mxu0
        %v946 = vadd.f32 %v917, %v945
        %v947 = vpop.f32.mrf.mxu0
        %v948 = vadd.f32 %v919, %v947
        %949 = vmatmul.bf16.gmra.mxu0 %v795
        %v950 = vpop.f32.mrf.mxu0
        %v951 = vadd.f32 %v922, %v950
        %v952 = vpop.f32.mrf.mxu0
        %v953 = vadd.f32 %v924, %v952
        %954 = vmatmul.bf16.gmra.mxu0 %v797
        %v955 = vpop.f32.mrf.mxu0
        %v956 = vadd.f32 %v927, %v955
        %v957 = vpop.f32.mrf.mxu0
        %v958 = vadd.f32 %v929, %v957
        %959 = vdwg.mxu0
        %v968 = vunpack.c.l.b16 %v333
        %v969 = vunpack.c.h.b16 %v333
        %v970 = vunpack.c.l.b16 %v334
        %v971 = vunpack.c.h.b16 %v334
        %v972 = vunpack.c.l.b16 %v335
        %v973 = vunpack.c.h.b16 %v335
        %v974 = vunpack.c.l.b16 %v336
        %v975 = vunpack.c.h.b16 %v336
        %v976 = vunpack.c.l.b16 %v337
        %v977 = vunpack.c.h.b16 %v337
        %v978 = vunpack.c.l.b16 %v338
        %v979 = vunpack.c.h.b16 %v338
        %v980 = vunpack.c.l.b16 %v339
        %v981 = vunpack.c.h.b16 %v339
        %v982 = vunpack.c.l.b16 %v340
        %v983 = vunpack.c.h.b16 %v340
        %v984 = vpack.c.b16 %v970, %v968
        %v985 = vpack.c.b16 %v971, %v969
        %v986 = vpack.c.b16 %v974, %v972
        %v987 = vpack.c.b16 %v975, %v973
        %v988 = vpack.c.b16 %v978, %v976
        %v989 = vpack.c.b16 %v979, %v977
        %v990 = vpack.c.b16 %v982, %v980
        %v991 = vpack.c.b16 %v983, %v981
        %v1032 = vunpack.c.l.b16 %v509
        %v1033 = vunpack.c.l.b16 %v510
        %v1034 = vunpack.c.l.b16 %v511
        %v1035 = vunpack.c.l.b16 %v512
        %v1036 = vunpack.c.l.b16 %v513
        %v1037 = vunpack.c.l.b16 %v514
        %v1038 = vunpack.c.l.b16 %v515
        %v1039 = vunpack.c.l.b16 %v516
        %v1040 = vunpack.c.l.b16 %v517
        %v1041 = vunpack.c.l.b16 %v518
        %v1042 = vunpack.c.l.b16 %v519
        %v1043 = vunpack.c.l.b16 %v520
        %v1044 = vunpack.c.l.b16 %v521
        %v1045 = vunpack.c.l.b16 %v522
        %v1046 = vunpack.c.l.b16 %v523
        %v1047 = vunpack.c.l.b16 %v524
        %v1048 = vunpack.c.l.b16 %v525
        %v1049 = vunpack.c.l.b16 %v526
        %v1050 = vunpack.c.l.b16 %v527
        %v1051 = vunpack.c.l.b16 %v528
        %v1052 = vunpack.c.l.b16 %v529
        %v1053 = vunpack.c.l.b16 %v530
        %v1054 = vunpack.c.l.b16 %v531
        %v1055 = vunpack.c.l.b16 %v532
        %v1056 = vunpack.c.l.b16 %v533
        %v1057 = vunpack.c.l.b16 %v534
        %v1058 = vunpack.c.l.b16 %v535
        %v1059 = vunpack.c.l.b16 %v536
        %v1060 = vunpack.c.l.b16 %v537
        %v1061 = vunpack.c.l.b16 %v538
        %v1062 = vunpack.c.l.b16 %v539
        %v1063 = vunpack.c.l.b16 %v540
        %v1064 = vpack.c.b16 %v1033, %v1032
        %v1065 = vpack.c.b16 %v1035, %v1034
        %v1066 = vpack.c.b16 %v1037, %v1036
        %v1067 = vpack.c.b16 %v1039, %v1038
        %v1068 = vpack.c.b16 %v1041, %v1040
        %v1069 = vpack.c.b16 %v1043, %v1042
        %v1070 = vpack.c.b16 %v1045, %v1044
        %v1071 = vpack.c.b16 %v1047, %v1046
        %v1072 = vpack.c.b16 %v1049, %v1048
        %v1073 = vpack.c.b16 %v1051, %v1050
        %v1074 = vpack.c.b16 %v1053, %v1052
        %v1075 = vpack.c.b16 %v1055, %v1054
        %v1076 = vpack.c.b16 %v1057, %v1056
        %v1077 = vpack.c.b16 %v1059, %v1058
        %v1078 = vpack.c.b16 %v1061, %v1060
        %v1079 = vpack.c.b16 %v1063, %v1062
        %1096 = vmatpush.bf16.msra.mxu0 %v1071
        %1097 = vmatpush.bf16.msra.mxu0 %v1070
        %1098 = vmatpush.bf16.msra.mxu0 %v1069
        %1099 = vmatpush.bf16.msra.mxu0 %v1068
        %1100 = vmatpush.bf16.msra.mxu0 %v1067
        %1101 = vmatpush.bf16.msra.mxu0 %v1066
        %1102 = vmatpush.bf16.msra.mxu0 %v1065
        %1103 = vmatpush.bf16.msra.mxu0 %v1064
        %1104 = vmatmul.bf16.gmra.mxu0 %v984
        %v1105 = vpop.f32.mrf.mxu0
        %v1106 = vadd.f32 %v941, %v1105
        %v1107 = vpop.f32.mrf.mxu0
        %v1108 = vadd.f32 %v943, %v1107
        %1109 = vmatmul.bf16.gmra.mxu0 %v986
        %v1110 = vpop.f32.mrf.mxu0
        %v1111 = vadd.f32 %v946, %v1110
        %v1112 = vpop.f32.mrf.mxu0
        %v1113 = vadd.f32 %v948, %v1112
        %1114 = vmatmul.bf16.gmra.mxu0 %v988
        %v1115 = vpop.f32.mrf.mxu0
        %v1116 = vadd.f32 %v951, %v1115
        %v1117 = vpop.f32.mrf.mxu0
        %v1118 = vadd.f32 %v953, %v1117
        %1119 = vmatmul.bf16.gmra.mxu0 %v990
        %v1120 = vpop.f32.mrf.mxu0
        %v1121 = vadd.f32 %v956, %v1120
        %v1122 = vpop.f32.mrf.mxu0
        %v1123 = vadd.f32 %v958, %v1122
        %1124 = vdwg.mxu0
        %1125 = vmatpush.bf16.msra.mxu0 %v1079
        %1126 = vmatpush.bf16.msra.mxu0 %v1078
        %1127 = vmatpush.bf16.msra.mxu0 %v1077
        %1128 = vmatpush.bf16.msra.mxu0 %v1076
        %1129 = vmatpush.bf16.msra.mxu0 %v1075
        %1130 = vmatpush.bf16.msra.mxu0 %v1074
        %1131 = vmatpush.bf16.msra.mxu0 %v1073
        %1132 = vmatpush.bf16.msra.mxu0 %v1072
        %1133 = vmatmul.bf16.gmra.mxu0 %v985
        %v1134 = vpop.f32.mrf.mxu0
        %v1135 = vadd.f32 %v1106, %v1134
        %v1136 = vpop.f32.mrf.mxu0
        %v1137 = vadd.f32 %v1108, %v1136
        %1138 = vmatmul.bf16.gmra.mxu0 %v987
        %v1139 = vpop.f32.mrf.mxu0
        %v1140 = vadd.f32 %v1111, %v1139
        %v1141 = vpop.f32.mrf.mxu0
        %v1142 = vadd.f32 %v1113, %v1141
        %1143 = vmatmul.bf16.gmra.mxu0 %v989
        %v1144 = vpop.f32.mrf.mxu0
        %v1145 = vadd.f32 %v1116, %v1144
        %v1146 = vpop.f32.mrf.mxu0
        %v1147 = vadd.f32 %v1118, %v1146
        %1148 = vmatmul.bf16.gmra.mxu0 %v991
        %v1149 = vpop.f32.mrf.mxu0
        %v1150 = vadd.f32 %v1121, %v1149
        %v1151 = vpop.f32.mrf.mxu0
        %v1152 = vadd.f32 %v1123, %v1151
        %1153 = vdwg.mxu0
        %v1186 = vunpack.c.l.b16 %v573
        %v1187 = vunpack.c.l.b16 %v574
        %v1188 = vunpack.c.l.b16 %v575
        %v1189 = vunpack.c.l.b16 %v576
        %v1190 = vunpack.c.l.b16 %v577
        %v1191 = vunpack.c.l.b16 %v578
        %v1192 = vunpack.c.l.b16 %v579
        %v1193 = vunpack.c.l.b16 %v580
        %v1194 = vunpack.c.l.b16 %v581
        %v1195 = vunpack.c.l.b16 %v582
        %v1196 = vunpack.c.l.b16 %v583
        %v1197 = vunpack.c.l.b16 %v584
        %v1198 = vunpack.c.l.b16 %v585
        %v1199 = vunpack.c.l.b16 %v586
        %v1200 = vunpack.c.l.b16 %v587
        %v1201 = vunpack.c.l.b16 %v588
        %v1202 = vunpack.c.l.b16 %v589
        %v1203 = vunpack.c.l.b16 %v590
        %v1204 = vunpack.c.l.b16 %v591
        %v1205 = vunpack.c.l.b16 %v592
        %v1206 = vunpack.c.l.b16 %v593
        %v1207 = vunpack.c.l.b16 %v594
        %v1208 = vunpack.c.l.b16 %v595
        %v1209 = vunpack.c.l.b16 %v596
        %v1210 = vunpack.c.l.b16 %v597
        %v1211 = vunpack.c.l.b16 %v598
        %v1212 = vunpack.c.l.b16 %v599
        %v1213 = vunpack.c.l.b16 %v600
        %v1214 = vunpack.c.l.b16 %v601
        %v1215 = vunpack.c.l.b16 %v602
        %v1216 = vunpack.c.l.b16 %v603
        %v1217 = vunpack.c.l.b16 %v604
        %v1218 = vpack.c.b16 %v1187, %v1186
        %v1219 = vpack.c.b16 %v1189, %v1188
        %v1220 = vpack.c.b16 %v1191, %v1190
        %v1221 = vpack.c.b16 %v1193, %v1192
        %v1222 = vpack.c.b16 %v1195, %v1194
        %v1223 = vpack.c.b16 %v1197, %v1196
        %v1224 = vpack.c.b16 %v1199, %v1198
        %v1225 = vpack.c.b16 %v1201, %v1200
        %v1226 = vpack.c.b16 %v1203, %v1202
        %v1227 = vpack.c.b16 %v1205, %v1204
        %v1228 = vpack.c.b16 %v1207, %v1206
        %v1229 = vpack.c.b16 %v1209, %v1208
        %v1230 = vpack.c.b16 %v1211, %v1210
        %v1231 = vpack.c.b16 %v1213, %v1212
        %v1232 = vpack.c.b16 %v1215, %v1214
        %v1233 = vpack.c.b16 %v1217, %v1216
        %1250 = vmatpush.bf16.msra.mxu0 %v1225
        %1251 = vmatpush.bf16.msra.mxu0 %v1224
        %1252 = vmatpush.bf16.msra.mxu0 %v1223
        %1253 = vmatpush.bf16.msra.mxu0 %v1222
        %1254 = vmatpush.bf16.msra.mxu0 %v1221
        %1255 = vmatpush.bf16.msra.mxu0 %v1220
        %1256 = vmatpush.bf16.msra.mxu0 %v1219
        %1257 = vmatpush.bf16.msra.mxu0 %v1218
        %1258 = vmatmul.bf16.gmra.mxu0 %v790
        %v1259 = vpop.f32.mrf.mxu0
        %v1260 = vadd.f32 0.0, %v1259
        %v1261 = vpop.f32.mrf.mxu0
        %v1262 = vadd.f32 0.0, %v1261
        %1263 = vmatmul.bf16.gmra.mxu0 %v792
        %v1264 = vpop.f32.mrf.mxu0
        %v1265 = vadd.f32 0.0, %v1264
        %v1266 = vpop.f32.mrf.mxu0
        %v1267 = vadd.f32 0.0, %v1266
        %1268 = vmatmul.bf16.gmra.mxu0 %v794
        %v1269 = vpop.f32.mrf.mxu0
        %v1270 = vadd.f32 0.0, %v1269
        %v1271 = vpop.f32.mrf.mxu0
        %v1272 = vadd.f32 0.0, %v1271
        %1273 = vmatmul.bf16.gmra.mxu0 %v796
        %v1274 = vpop.f32.mrf.mxu0
        %v1275 = vadd.f32 0.0, %v1274
        %v1276 = vpop.f32.mrf.mxu0
        %1277 = vdwg.mxu0
        %1278 = vmatpush.bf16.msra.mxu0 %v1233
        %1279 = vmatpush.bf16.msra.mxu0 %v1232
        %1280 = vmatpush.bf16.msra.mxu0 %v1231
        %1281 = vmatpush.bf16.msra.mxu0 %v1230
        %1282 = vmatpush.bf16.msra.mxu0 %v1229
        %1283 = vmatpush.bf16.msra.mxu0 %v1228
        %1284 = vmatpush.bf16.msra.mxu0 %v1227
        %1285 = vmatpush.bf16.msra.mxu0 %v1226
        %1286 = vmatmul.bf16.gmra.mxu0 %v791
        %v1287 = vpop.f32.mrf.mxu0
        %v1288 = vadd.f32 %v1260, %v1287
        %v1289 = vpop.f32.mrf.mxu0
        %v1290 = vadd.f32 %v1262, %v1289
        %1291 = vmatmul.bf16.gmra.mxu0 %v793
        %v1292 = vpop.f32.mrf.mxu0
        %v1293 = vadd.f32 %v1265, %v1292
        %v1294 = vpop.f32.mrf.mxu0
        %v1295 = vadd.f32 %v1267, %v1294
        %1296 = vmatmul.bf16.gmra.mxu0 %v795
        %v1297 = vpop.f32.mrf.mxu0
        %v1298 = vadd.f32 %v1270, %v1297
        %v1299 = vpop.f32.mrf.mxu0
        %v1300 = vadd.f32 %v1272, %v1299
        %1301 = vmatmul.bf16.gmra.mxu0 %v797
        %v1302 = vpop.f32.mrf.mxu0
        %v1303 = vadd.f32 %v1275, %v1302
        %v1304 = vpop.f32.mrf.mxu0
        %1305 = vdwg.mxu0
        %v1306 = vadd.f32 %v1135, 0.0
        %v1307 = vadd.f32 %v1137, %v1288
        %v1308 = vadd.f32 %v1140, %v1290
        %v1309 = vadd.f32 %v1142, %v1293
        %v1310 = vadd.f32 %v1145, %v1295
        %v1311 = vadd.f32 %v1147, %v1298
        %v1312 = vadd.f32 %v1150, %v1300
        %v1313 = vadd.f32 %v1152, %v1303
        %v1346 = vunpack.c.l.b16 %v605
        %v1347 = vunpack.c.l.b16 %v606
        %v1348 = vunpack.c.l.b16 %v607
        %v1349 = vunpack.c.l.b16 %v608
        %v1350 = vunpack.c.l.b16 %v609
        %v1351 = vunpack.c.l.b16 %v610
        %v1352 = vunpack.c.l.b16 %v611
        %v1353 = vunpack.c.l.b16 %v612
        %v1354 = vunpack.c.l.b16 %v613
        %v1355 = vunpack.c.l.b16 %v614
        %v1356 = vunpack.c.l.b16 %v615
        %v1357 = vunpack.c.l.b16 %v616
        %v1358 = vunpack.c.l.b16 %v617
        %v1359 = vunpack.c.l.b16 %v618
        %v1360 = vunpack.c.l.b16 %v619
        %v1361 = vunpack.c.l.b16 %v620
        %v1362 = vunpack.c.l.b16 %v621
        %v1363 = vunpack.c.l.b16 %v622
        %v1364 = vunpack.c.l.b16 %v623
        %v1365 = vunpack.c.l.b16 %v624
        %v1366 = vunpack.c.l.b16 %v625
        %v1367 = vunpack.c.l.b16 %v626
        %v1368 = vunpack.c.l.b16 %v627
        %v1369 = vunpack.c.l.b16 %v628
        %v1370 = vunpack.c.l.b16 %v629
        %v1371 = vunpack.c.l.b16 %v630
        %v1372 = vunpack.c.l.b16 %v631
        %v1373 = vunpack.c.l.b16 %v632
        %v1374 = vunpack.c.l.b16 %v633
        %v1375 = vunpack.c.l.b16 %v634
        %v1376 = vunpack.c.l.b16 %v635
        %v1377 = vunpack.c.l.b16 %v636
        %v1378 = vpack.c.b16 %v1347, %v1346
        %v1379 = vpack.c.b16 %v1349, %v1348
        %v1380 = vpack.c.b16 %v1351, %v1350
        %v1381 = vpack.c.b16 %v1353, %v1352
        %v1382 = vpack.c.b16 %v1355, %v1354
        %v1383 = vpack.c.b16 %v1357, %v1356
        %v1384 = vpack.c.b16 %v1359, %v1358
        %v1385 = vpack.c.b16 %v1361, %v1360
        %v1386 = vpack.c.b16 %v1363, %v1362
        %v1387 = vpack.c.b16 %v1365, %v1364
        %v1388 = vpack.c.b16 %v1367, %v1366
        %v1389 = vpack.c.b16 %v1369, %v1368
        %v1390 = vpack.c.b16 %v1371, %v1370
        %v1391 = vpack.c.b16 %v1373, %v1372
        %v1392 = vpack.c.b16 %v1375, %v1374
        %v1393 = vpack.c.b16 %v1377, %v1376
        %1410 = vmatpush.bf16.msra.mxu0 %v1385
        %1411 = vmatpush.bf16.msra.mxu0 %v1384
        %1412 = vmatpush.bf16.msra.mxu0 %v1383
        %1413 = vmatpush.bf16.msra.mxu0 %v1382
        %1414 = vmatpush.bf16.msra.mxu0 %v1381
        %1415 = vmatpush.bf16.msra.mxu0 %v1380
        %1416 = vmatpush.bf16.msra.mxu0 %v1379
        %1417 = vmatpush.bf16.msra.mxu0 %v1378
        %1418 = vmatmul.bf16.gmra.mxu0 %v985
        %v1419 = vpop.f32.mrf.mxu0
        %v1420 = vadd.f32 0.0, %v1419
        %v1421 = vpop.f32.mrf.mxu0
        %v1422 = vadd.f32 0.0, %v1421
        %1423 = vmatmul.bf16.gmra.mxu0 %v987
        %v1424 = vpop.f32.mrf.mxu0
        %v1425 = vadd.f32 0.0, %v1424
        %v1426 = vpop.f32.mrf.mxu0
        %v1427 = vadd.f32 0.0, %v1426
        %1428 = vmatmul.bf16.gmra.mxu0 %v989
        %v1429 = vpop.f32.mrf.mxu0
        %v1430 = vadd.f32 0.0, %v1429
        %v1431 = vpop.f32.mrf.mxu0
        %v1432 = vadd.f32 0.0, %v1431
        %1433 = vmatmul.bf16.gmra.mxu0 %v991
        %v1434 = vpop.f32.mrf.mxu0
        %v1435 = vadd.f32 0.0, %v1434
        %v1436 = vpop.f32.mrf.mxu0
        %v1437 = vadd.f32 0.0, %v1436
        %1438 = vdwg.mxu0
        %1439 = vmatpush.bf16.msra.mxu0 %v1393
        %1440 = vmatpush.bf16.msra.mxu0 %v1392
        %1441 = vmatpush.bf16.msra.mxu0 %v1391
        %1442 = vmatpush.bf16.msra.mxu0 %v1390
        %1443 = vmatpush.bf16.msra.mxu0 %v1389
        %1444 = vmatpush.bf16.msra.mxu0 %v1388
        %1445 = vmatpush.bf16.msra.mxu0 %v1387
        %1446 = vmatpush.bf16.msra.mxu0 %v1386
        %1447 = vmatmul.bf16.gmra.mxu0 %v791
        %v1448 = vpop.f32.mrf.mxu0
        %v1449 = vadd.f32 %v1420, %v1448
        %v1450 = vpop.f32.mrf.mxu0
        %v1451 = vadd.f32 %v1422, %v1450
        %1452 = vmatmul.bf16.gmra.mxu0 %v793
        %v1453 = vpop.f32.mrf.mxu0
        %v1454 = vadd.f32 %v1425, %v1453
        %v1455 = vpop.f32.mrf.mxu0
        %v1456 = vadd.f32 %v1427, %v1455
        %1457 = vmatmul.bf16.gmra.mxu0 %v795
        %v1458 = vpop.f32.mrf.mxu0
        %v1459 = vadd.f32 %v1430, %v1458
        %v1460 = vpop.f32.mrf.mxu0
        %v1461 = vadd.f32 %v1432, %v1460
        %1462 = vmatmul.bf16.gmra.mxu0 %v797
        %v1463 = vpop.f32.mrf.mxu0
        %v1464 = vadd.f32 %v1435, %v1463
        %v1465 = vpop.f32.mrf.mxu0
        %v1466 = vadd.f32 %v1437, %v1465
        %1467 = vdwg.mxu0
        %vm1476 = vcmask 1040384
        %v1477 = vrot.slane %v1449, 7
        %v1478 = vrot.slane %v1451, 7
        %v1479 = vsel %vm1476, %v1477, %v1478
        %v1480 = vrot.slane %v1454, 7
        %v1481 = vsel %vm1476, %v1478, %v1480
        %v1482 = vrot.slane %v1456, 7
        %v1483 = vsel %vm1476, %v1480, %v1482
        %v1484 = vrot.slane %v1459, 7
        %v1485 = vsel %vm1476, %v1482, %v1484
        %v1486 = vrot.slane %v1461, 7
        %v1487 = vsel %vm1476, %v1484, %v1486
        %v1488 = vrot.slane %v1464, 7
        %v1489 = vsel %vm1476, %v1486, %v1488
        %v1490 = vrot.slane %v1466, 7
        %v1491 = vsel %vm1476, %v1488, %v1490
        %v1500 = vsel %vm1476, 0.0, %v1477
        %v1501 = vsel %vm758, 1, 0
        %v1502 = vsel %vm759, 1, 0
        %v1503 = vsel %vm760, 1, 0
        %v1504 = vsel %vm761, 1, 0
        %v1505 = vsel %vm762, 1, 0
        %v1506 = vsel %vm763, 1, 0
        %v1507 = vsel %vm764, 1, 0
        %v1508 = vsel %vm765, 1, 0
        %vm1509 = vcmp.eq.s32.totalorder %v1501, 1
        %vm1510 = vcmp.eq.s32.totalorder %v1502, 1
        %vm1511 = vcmp.eq.s32.totalorder %v1503, 1
        %vm1512 = vcmp.eq.s32.totalorder %v1504, 1
        %vm1513 = vcmp.eq.s32.totalorder %v1505, 1
        %vm1514 = vcmp.eq.s32.totalorder %v1506, 1
        %vm1515 = vcmp.eq.s32.totalorder %v1507, 1
        %vm1516 = vcmp.eq.s32.totalorder %v1508, 1
        %v1517 = vsel %vm1509, %v1500, 0.0
        %v1518 = vsel %vm1510, %v1479, 0.0
        %v1519 = vsel %vm1511, %v1481, 0.0
        %v1520 = vsel %vm1512, %v1483, 0.0
        %v1521 = vsel %vm1513, %v1485, 0.0
        %v1522 = vsel %vm1514, %v1487, 0.0
        %v1523 = vsel %vm1515, %v1489, 0.0
        %v1524 = vsel %vm1516, %v1491, 0.0
        %v1525 = vadd.f32 %v1306, %v1517
        %v1526 = vadd.f32 %v1307, %v1518
        %v1527 = vadd.f32 %v1308, %v1519
        %v1528 = vadd.f32 %v1309, %v1520
        %v1529 = vadd.f32 %v1310, %v1521
        %v1530 = vadd.f32 %v1311, %v1522
        %v1531 = vadd.f32 %v1312, %v1523
        %v1532 = vadd.f32 %v1313, %v1524
        %v1549 = vunpack.c.l.b16 %v637
        %v1550 = vunpack.c.l.b16 %v638
        %v1551 = vunpack.c.l.b16 %v639
        %v1552 = vunpack.c.l.b16 %v640
        %v1553 = vunpack.c.l.b16 %v641
        %v1554 = vunpack.c.l.b16 %v642
        %v1555 = vunpack.c.l.b16 %v643
        %v1556 = vunpack.c.l.b16 %v644
        %v1557 = vunpack.c.l.b16 %v645
        %v1558 = vunpack.c.l.b16 %v646
        %v1559 = vunpack.c.l.b16 %v647
        %v1560 = vunpack.c.l.b16 %v648
        %v1561 = vunpack.c.l.b16 %v649
        %v1562 = vunpack.c.l.b16 %v650
        %v1563 = vunpack.c.l.b16 %v651
        %v1564 = vunpack.c.l.b16 %v652
        %v1565 = vpack.c.b16 %v1550, %v1549
        %v1566 = vpack.c.b16 %v1552, %v1551
        %v1567 = vpack.c.b16 %v1554, %v1553
        %v1568 = vpack.c.b16 %v1556, %v1555
        %v1569 = vpack.c.b16 %v1558, %v1557
        %v1570 = vpack.c.b16 %v1560, %v1559
        %v1571 = vpack.c.b16 %v1562, %v1561
        %v1572 = vpack.c.b16 %v1564, %v1563
        %1581 = vmatpush.bf16.msra.mxu0 %v1572
        %1582 = vmatpush.bf16.msra.mxu0 %v1571
        %1583 = vmatpush.bf16.msra.mxu0 %v1570
        %1584 = vmatpush.bf16.msra.mxu0 %v1569
        %1585 = vmatpush.bf16.msra.mxu0 %v1568
        %1586 = vmatpush.bf16.msra.mxu0 %v1567
        %1587 = vmatpush.bf16.msra.mxu0 %v1566
        %1588 = vmatpush.bf16.msra.mxu0 %v1565
        %1589 = vmatmul.bf16.gmra.mxu0 %v791
        %v1590 = vpop.f32.mrf.mxu0
        %v1591 = vadd.f32 0.0, %v1590
        %v1592 = vpop.f32.mrf.mxu0
        %v1593 = vadd.f32 0.0, %v1592
        %1594 = vmatmul.bf16.gmra.mxu0 %v793
        %v1595 = vpop.f32.mrf.mxu0
        %v1596 = vadd.f32 0.0, %v1595
        %v1597 = vpop.f32.mrf.mxu0
        %v1598 = vadd.f32 0.0, %v1597
        %1599 = vmatmul.bf16.gmra.mxu0 %v795
        %v1600 = vpop.f32.mrf.mxu0
        %v1601 = vadd.f32 0.0, %v1600
        %v1602 = vpop.f32.mrf.mxu0
        %v1603 = vadd.f32 0.0, %v1602
        %1604 = vmatmul.bf16.gmra.mxu0 %v797
        %v1605 = vpop.f32.mrf.mxu0
        %v1606 = vadd.f32 0.0, %v1605
        %v1607 = vpop.f32.mrf.mxu0
        %1608 = vdwg.mxu0
        %v1616 = vrot.slane %v1591, 7
        %v1617 = vrot.slane %v1593, 7
        %v1618 = vsel %vm1476, %v1616, %v1617
        %v1619 = vrot.slane %v1596, 7
        %v1620 = vsel %vm1476, %v1617, %v1619
        %v1621 = vrot.slane %v1598, 7
        %v1622 = vsel %vm1476, %v1619, %v1621
        %v1623 = vrot.slane %v1601, 7
        %v1624 = vsel %vm1476, %v1621, %v1623
        %v1625 = vrot.slane %v1603, 7
        %v1626 = vsel %vm1476, %v1623, %v1625
        %v1627 = vrot.slane %v1606, 7
        %v1628 = vsel %vm1476, %v1625, %v1627
        %v1636 = vsel %vm1476, 0.0, %v1616
        %v1637 = vsel %vm1510, %v1636, 0.0
        %v1638 = vsel %vm1511, %v1618, 0.0
        %v1639 = vsel %vm1512, %v1620, 0.0
        %v1640 = vsel %vm1513, %v1622, 0.0
        %v1641 = vsel %vm1514, %v1624, 0.0
        %v1642 = vsel %vm1515, %v1626, 0.0
        %v1643 = vsel %vm1516, %v1628, 0.0
        %v1644 = vadd.f32 %v1525, 0.0
        %v1645 = vadd.f32 %v1526, %v1637
        %v1646 = vadd.f32 %v1527, %v1638
        %v1647 = vadd.f32 %v1528, %v1639
        %v1648 = vadd.f32 %v1529, %v1640
        %v1649 = vadd.f32 %v1530, %v1641
        %v1650 = vadd.f32 %v1531, %v1642
        %v1651 = vadd.f32 %v1532, %v1643
        %v1652 = vld [vmem:[%s3] sm:$0x1]
        %v1654 = vperm.slane %v1652, 0
        %v1656 = vadd.f32 %v1644, %v1654
        %v1657 = vadd.f32 %v1645, %v1654
        %v1658 = vadd.f32 %v1646, %v1654
        %v1659 = vadd.f32 %v1647, %v1654
        %v1660 = vadd.f32 %v1648, %v1654
        %v1661 = vadd.f32 %v1649, %v1654
        %v1662 = vadd.f32 %v1650, %v1654
        %v1663 = vadd.f32 %v1651, %v1654
        %1664 = vst [vmem:[%s316] sm:$0xff] %v1656
        %1665 = vst [vmem:[%s316 + $0x8] sm:$0xff] %v1657
        %1666 = vst [vmem:[%s316 + $0x10] sm:$0xff] %v1658
        %1667 = vst [vmem:[%s316 + $0x18] sm:$0xff] %v1659
        %1668 = vst [vmem:[%s316 + $0x20] sm:$0xff] %v1660
        %1669 = vst [vmem:[%s316 + $0x28] sm:$0xff] %v1661
        %1670 = vst [vmem:[%s316 + $0x30] sm:$0xff] %v1662
        %1671 = vst [vmem:[%s316 + $0x38] sm:$0xff] %v1663
        %s1672 = sand.u32 %s120, 1
        %s1673 = scalar_lea.sflag [#allocation5], %s1672
        %s1674 = sand.u32 %s120, 1
        %s1675 = smul.addr %s1674, 64
        %s1676 = scalar_lea.vmem [#allocation4], %s1675
        // Predicated region
        $region83: #{downsample2d.1} parent=73 // pred_check
          %p1677 = pneg %p130
        $region84: #{downsample2d.1} parent=73 // pred_check_branch
          %1679 = sbr.rel (%p1677) target = $region86
        $region85: #{downsample2d.1} parent=73 // pred_region
          %1681 = vsyncadd %s1673, 0
          %s1682 = smul.addr %s18, 8
          %s1683 = smul.addr %s1682, 8
          %s1684 = scalar_lea.hbm %s4, %s1683
          %s1685 = sshll.u32 %s1676, 4
          %s1686 = int_to_ptr.vmem [resolvable:$true] %s1685
          %s1687 = sshll.u32 %s1684, 4
          %s1688 = int_to_ptr.hbm [resolvable:$true] %s1687
          %1693 = dma.vmem_to_hbm [thread:$0]  %s1686, 1024, %s1688, %s1673, 128, 128, 8
        $region86: #{downsample2d.1} parent=73 // pred_fallthru
          _
      $region74: #{downsample2d.1} parent=5 // pred_fallthru
        _
      %p1694 = scmp.le.s32.totalorder 2, %s13
      // Predicated region
      $region87: #{downsample2d.1} parent=5 // pred_check
        %p1695 = pneg %p1694
      $region88: #{downsample2d.1} parent=5 // pred_check_branch
        %1697 = sbr.rel (%p1695) target = $region90
      $region89: #{downsample2d.1} parent=5 // pred_region
        %s1698 = ssub.s32 %s13, 2
        // Predicated region
        $region91: #{downsample2d.1} parent=89 // pred_check
          %p1699 = pneg %p136
        $region92: #{downsample2d.1} parent=89 // pred_check_branch
          %1701 = sbr.rel (%p1699) target = $region94
        $region93: #{downsample2d.1} parent=89 // pred_region
          %s1702 = sand.u32 %s121, 1
          %s1703 = scalar_lea.sflag [#allocation5], %s1702
          %s1704 = sand.u32 %s121, 1
          %s1705 = smul.addr %s1704, 64
          %s1706 = scalar_lea.vmem [#allocation4], %s1705
          %1708 = dma.done %s1703, 1024
        $region94: #{downsample2d.1} parent=89 // pred_fallthru
          _
      $region90: #{downsample2d.1} parent=5 // pred_fallthru
        _
    $region6: #{downsample2d.1} parent=1 // loop_footer
      %s17 = sadd.s32 1, %s13
    $region7: #{downsample2d.1} parent=1 // loop_footer_branch
      %12 = sbr.rel target = $region3
    $region8: #{downsample2d.1} parent=1 // loop_exit
      _
    %1709 = vsyncpa [#allocation5], 1
    %s1710 = scalar_lea.sflag [#allocation5], 1
    %1711 = vsyncpa %s1710, 1

</llo_original>
